<compile_context>
chip_gen: v7x
topology: tpu7x:2x2x1
jax: 0.10.0
libtpu: 0.0.40
codegen_flags: <defaults>
</compile_context>

<pallas_src>
import jax
import jax.numpy as jnp
from jax.experimental import pallas as pl
from jax.experimental.pallas import tpu as pltpu

HIDDEN = 512


def _dqn_kernel(x_ref,
                w1c_ref, b1c_ref,
                wv2_ref, bv2_ref,
                wa2_ref, ba2_ref,
                wv3_ref, bv3_ref,
                wa3_ref, ba3_ref,
                out_ref):
    # ---- fused layer 1: x @ [Wv1 | Wa1]  (one MXU pass instead of two) ----
    xb = x_ref[...].astype(jnp.bfloat16)                      # (TB, obs_len)
    h1 = jnp.dot(xb, w1c_ref[...],
                 preferred_element_type=jnp.float32) + b1c_ref[...]
    # Cast once to bf16 and slice the bf16 halves (halves the h1 VMEM traffic).
    h1 = jnp.maximum(h1, 0.0).astype(jnp.bfloat16)            # (TB, 1024) bf16
    h = h1[:, :HIDDEN]                                        # value-branch hidden
    g = h1[:, HIDDEN:]                                        # advantage-branch hidden

    # ---- layer 2 (separate inputs -> separate 512x512 matmuls) ----
    h2 = jnp.dot(h, wv2_ref[...],
                 preferred_element_type=jnp.float32) + bv2_ref[...]
    h2 = jnp.maximum(h2, 0.0)                                 # (TB, 512) f32 (VPU head)
    g2 = jnp.dot(g, wa2_ref[...],
                 preferred_element_type=jnp.float32) + ba2_ref[...]
    g2 = jnp.maximum(g2, 0.0).astype(jnp.bfloat16)            # (TB, 512) bf16

    # ---- value head: N=1 matmul replaced by VPU mul + lane reduce ----
    val = jnp.sum(h2 * wv3_ref[...], axis=-1, keepdims=True) + bv3_ref[...]  # (TB, 1)

    # ---- advantage head ----
    adv = jnp.dot(g2, wa3_ref[...],
                  preferred_element_type=jnp.float32) + ba3_ref[...]         # (TB, A)

    # ---- dueling combine ----
    adv_mean = jnp.mean(adv, axis=-1, keepdims=True)
    out_ref[...] = val + adv - adv_mean


def _round_up(x, m):
    return ((x + m - 1) // m) * m


def simple_ffdqn_forward(x, params, block_b=1024):
    """x: (B, obs_len) f32.  params: dict from init_params (bf16 weights)."""
    B, obs_len = x.shape
    A = params["wa3"].shape[1]

    # --- batch tiling ---
    # At least 2 grid steps whenever the batch allows it (each tile >= 8 rows),
    # so v7x can shard the "parallel" axis across its 2 TensorCores; tile size
    # capped at block_b to amortize the ~0.35 us per-step pipeline overhead.
    n_blocks = pl.cdiv(B, block_b)
    if B >= 16:
        n_blocks = max(n_blocks, 2)
    TB = _round_up(pl.cdiv(B, n_blocks), 8)
    Bp = n_blocks * TB
    x_in = jnp.pad(x, ((0, Bp - B), (0, 0))) if Bp != B else x
    grid = (n_blocks,)

    def resident(arr):
        # Whole-array block, same block every grid step -> stays in VMEM.
        nd = arr.ndim
        return pl.BlockSpec(arr.shape, lambda i, _n=nd: (0,) * _n)

    args = (x_in,
            params["w1c"], params["b1c"],
            params["wv2"], params["bv2"],
            params["wa2"], params["ba2"],
            params["wv3"], params["bv3"],
            params["wa3"], params["ba3"])

    in_specs = [pl.BlockSpec((TB, obs_len), lambda i: (i, 0))]
    in_specs += [resident(a) for a in args[1:]]
    out_specs = pl.BlockSpec((TB, A), lambda i: (i, 0))

    weight_bytes = sum(int(a.size) * a.dtype.itemsize for a in args[1:])
    flops = 2 * Bp * (obs_len * 2 * HIDDEN + 2 * HIDDEN * HIDDEN + HIDDEN * (1 + A))
    cost = pl.CostEstimate(
        flops=int(flops),
        transcendentals=0,
        bytes_accessed=int(x_in.size * x_in.dtype.itemsize + Bp * A * 4 + weight_bytes),
    )

    out = pl.pallas_call(
        _dqn_kernel,
        out_shape=jax.ShapeDtypeStruct((Bp, A), jnp.float32),
        grid=grid,
        in_specs=in_specs,
        out_specs=out_specs,
        compiler_params=pltpu.CompilerParams(
            dimension_semantics=("parallel",),
            vmem_limit_bytes=64 << 20,      # v5e scoped default is only 16 MiB
        ),
        cost_estimate=cost,
    )(*args)
    return out[:B]


def init_params(key, obs_len, actions_n):
    """PyTorch-default-like init U(-1/sqrt(fan_in), 1/sqrt(fan_in)).
    Weights stored as (in, out) (= torch weight.T); biases as (1, out).
    Matmul weights are bf16; biases and the tiny value-head row stay f32."""
    def linear(k, fan_in, fan_out):
        kw, kb = jax.random.split(k)
        bound = 1.0 / (fan_in ** 0.5)
        w = jax.random.uniform(kw, (fan_in, fan_out), jnp.float32, -bound, bound)
        b = jax.random.uniform(kb, (1, fan_out), jnp.float32, -bound, bound)
        return w, b

    ks = jax.random.split(key, 6)
    wv1, bv1 = linear(ks[0], obs_len, HIDDEN)
    wv2, bv2 = linear(ks[1], HIDDEN, HIDDEN)
    wv3, bv3 = linear(ks[2], HIDDEN, 1)
    wa1, ba1 = linear(ks[3], obs_len, HIDDEN)
    wa2, ba2 = linear(ks[4], HIDDEN, HIDDEN)
    wa3, ba3 = linear(ks[5], HIDDEN, actions_n)

    bf16 = jnp.bfloat16
    return {
        # fused first layer: [value | advantage]
        "w1c": jnp.concatenate([wv1, wa1], axis=1).astype(bf16),   # (obs_len, 1024)
        "b1c": jnp.concatenate([bv1, ba1], axis=1),                # (1, 1024) f32
        "wv2": wv2.astype(bf16), "bv2": bv2,
        "wa2": wa2.astype(bf16), "ba2": ba2,
        # value head as an f32 row vector (computed on VPU, not MXU)
        "wv3": wv3.reshape(1, HIDDEN), "bv3": bv3,                 # (1,512), (1,1)
        "wa3": wa3.astype(bf16), "ba3": ba3,
    }


def reference_forward(x, p):
    """Pure-JAX reference mirroring the kernel's bf16 rounding of matmul inputs."""
    f32 = jnp.float32
    bf16 = jnp.bfloat16

    def rd(a):  # round-trip through bf16 like the kernel's MXU inputs
        return a.astype(bf16).astype(f32)

    h1 = jnp.maximum(
        jnp.dot(rd(x), p["w1c"].astype(f32), precision="highest") + p["b1c"], 0.0)
    h, g = h1[:, :HIDDEN], h1[:, HIDDEN:]
    h2 = jnp.maximum(
        jnp.dot(rd(h), p["wv2"].astype(f32), precision="highest") + p["bv2"], 0.0)
    g2 = jnp.maximum(
        jnp.dot(rd(g), p["wa2"].astype(f32), precision="highest") + p["ba2"], 0.0)
    val = jnp.sum(h2 * p["wv3"], axis=-1, keepdims=True) + p["bv3"]
    adv = jnp.dot(rd(g2), p["wa3"].astype(f32), precision="highest") + p["ba3"]
    return val + adv - jnp.mean(adv, axis=-1, keepdims=True)


if __name__ == "__main__":
    obs_len = 32
    actions_n = 8
    batch = 2

    key = jax.random.PRNGKey(0)
    k_x, k_p = jax.random.split(key)
    x = jax.random.normal(k_x, (batch, obs_len), dtype=jnp.float32)
    params = init_params(k_p, obs_len, actions_n)

    out = simple_ffdqn_forward(x, params)
    out = jax.block_until_ready(out)

    ref = reference_forward(x, params)
    assert out.shape == (batch, actions_n)
    assert jnp.allclose(out, ref, atol=2e-2, rtol=2e-2), "mismatch vs JAX reference"

    # Also exercise a batch that forces a multi-step parallel grid (no padding).
    x_big = jax.random.normal(k_x, (64, obs_len), dtype=jnp.float32)
    out_big = jax.block_until_ready(simple_ffdqn_forward(x_big, params))
    ref_big = reference_forward(x_big, params)
    assert out_big.shape == (64, actions_n)
    assert jnp.allclose(out_big, ref_big, atol=2e-2, rtol=2e-2), "mismatch (big batch)"

    print("KERNEL_OK")
</pallas_src>

<mosaic_0001>
module attributes {stable_mosaic.version = 11 : i64} {
  func.func @_dqn_kernel(%arg0: i32, %arg1: memref<8x32xf32, #tpu.memory_space<vmem>>, %arg2: memref<32x1024xbf16, #tpu.memory_space<vmem>>, %arg3: memref<1x1024xf32, #tpu.memory_space<vmem>>, %arg4: memref<512x512xbf16, #tpu.memory_space<vmem>>, %arg5: memref<1x512xf32, #tpu.memory_space<vmem>>, %arg6: memref<512x512xbf16, #tpu.memory_space<vmem>>, %arg7: memref<1x512xf32, #tpu.memory_space<vmem>>, %arg8: memref<1x512xf32, #tpu.memory_space<vmem>>, %arg9: memref<1x1xf32, #tpu.memory_space<vmem>>, %arg10: memref<512x8xbf16, #tpu.memory_space<vmem>>, %arg11: memref<1x8xf32, #tpu.memory_space<vmem>>, %arg12: memref<8x8xf32, #tpu.memory_space<vmem>>) attributes {dimension_semantics = [#tpu.dimension_semantics<parallel>], iteration_bounds = array<i64: 1>, scalar_prefetch = 0 : i64, scratch_operands = 0 : i64, tpu.core_type = #tpu.core_type<tc>, window_params = [{transform_indices = @transform_0, window_bounds = array<i64: 8, 32>}, {pipeline_mode = #tpu.pipeline_mode<synchronous>, transform_indices = @transform_1, window_bounds = array<i64: 32, 1024>}, {pipeline_mode = #tpu.pipeline_mode<synchronous>, transform_indices = @transform_2, window_bounds = array<i64: 1, 1024>}, {pipeline_mode = #tpu.pipeline_mode<synchronous>, transform_indices = @transform_3, window_bounds = array<i64: 512, 512>}, {pipeline_mode = #tpu.pipeline_mode<synchronous>, transform_indices = @transform_4, window_bounds = array<i64: 1, 512>}, {pipeline_mode = #tpu.pipeline_mode<synchronous>, transform_indices = @transform_5, window_bounds = array<i64: 512, 512>}, {pipeline_mode = #tpu.pipeline_mode<synchronous>, transform_indices = @transform_6, window_bounds = array<i64: 1, 512>}, {pipeline_mode = #tpu.pipeline_mode<synchronous>, transform_indices = @transform_7, window_bounds = array<i64: 1, 512>}, {pipeline_mode = #tpu.pipeline_mode<synchronous>, transform_indices = @transform_8, window_bounds = array<i64: 1, 1>}, {pipeline_mode = #tpu.pipeline_mode<synchronous>, transform_indices = @transform_9, window_bounds = array<i64: 512, 8>}, {pipeline_mode = #tpu.pipeline_mode<synchronous>, transform_indices = @transform_10, window_bounds = array<i64: 1, 8>}, {transform_indices = @transform_11, window_bounds = array<i64: 8, 8>}]} {
    %c0 = arith.constant 0 : index
    %c0_0 = arith.constant 0 : index
    %0 = vector.load %arg1[%c0, %c0_0] : memref<8x32xf32, #tpu.memory_space<vmem>>, vector<8x32xf32>
    %1 = arith.truncf %0 : vector<8x32xf32> to vector<8x32xbf16>
    %c0_1 = arith.constant 0 : index
    %c0_2 = arith.constant 0 : index
    %2 = vector.load %arg2[%c0_1, %c0_2] : memref<32x1024xbf16, #tpu.memory_space<vmem>>, vector<32x1024xbf16>
    %cst = arith.constant dense<0.000000e+00> : vector<8x1024xf32>
    %3 = tpu.matmul %1, %2, %cst {dimension_numbers = #tpu.dot_dimension_numbers<[1], [0], [0], [1], [0, 0, 1, 1], [], []>} : vector<8x32xbf16>, vector<32x1024xbf16>, vector<8x1024xf32> -> vector<8x1024xf32>
    %c0_3 = arith.constant 0 : index
    %c0_4 = arith.constant 0 : index
    %4 = vector.load %arg3[%c0_3, %c0_4] : memref<1x1024xf32, #tpu.memory_space<vmem>>, vector<1x1024xf32>
    %5 = vector.broadcast %4 : vector<1x1024xf32> to vector<8x1024xf32>
    %6 = arith.addf %3, %5 : vector<8x1024xf32>
    %cst_5 = arith.constant 0.000000e+00 : f32
    %7 = vector.broadcast %cst_5 : f32 to vector<8x1024xf32>
    %8 = arith.maximumf %6, %7 : vector<8x1024xf32>
    %9 = arith.truncf %8 : vector<8x1024xf32> to vector<8x1024xbf16>
    %10 = vector.extract_strided_slice %9 {offsets = [0, 0], sizes = [8, 512], strides = [1, 1]} : vector<8x1024xbf16> to vector<8x512xbf16>
    %11 = vector.extract_strided_slice %9 {offsets = [0, 512], sizes = [8, 512], strides = [1, 1]} : vector<8x1024xbf16> to vector<8x512xbf16>
    %c0_6 = arith.constant 0 : index
    %c0_7 = arith.constant 0 : index
    %12 = vector.load %arg4[%c0_6, %c0_7] : memref<512x512xbf16, #tpu.memory_space<vmem>>, vector<512x512xbf16>
    %cst_8 = arith.constant dense<0.000000e+00> : vector<8x512xf32>
    %13 = tpu.matmul %10, %12, %cst_8 {dimension_numbers = #tpu.dot_dimension_numbers<[1], [0], [0], [1], [0, 0, 1, 1], [], []>} : vector<8x512xbf16>, vector<512x512xbf16>, vector<8x512xf32> -> vector<8x512xf32>
    %c0_9 = arith.constant 0 : index
    %c0_10 = arith.constant 0 : index
    %14 = vector.load %arg5[%c0_9, %c0_10] : memref<1x512xf32, #tpu.memory_space<vmem>>, vector<1x512xf32>
    %15 = vector.broadcast %14 : vector<1x512xf32> to vector<8x512xf32>
    %16 = arith.addf %13, %15 : vector<8x512xf32>
    %cst_11 = arith.constant 0.000000e+00 : f32
    %17 = vector.broadcast %cst_11 : f32 to vector<8x512xf32>
    %18 = arith.maximumf %16, %17 : vector<8x512xf32>
    %c0_12 = arith.constant 0 : index
    %c0_13 = arith.constant 0 : index
    %19 = vector.load %arg6[%c0_12, %c0_13] : memref<512x512xbf16, #tpu.memory_space<vmem>>, vector<512x512xbf16>
    %cst_14 = arith.constant dense<0.000000e+00> : vector<8x512xf32>
    %20 = tpu.matmul %11, %19, %cst_14 {dimension_numbers = #tpu.dot_dimension_numbers<[1], [0], [0], [1], [0, 0, 1, 1], [], []>} : vector<8x512xbf16>, vector<512x512xbf16>, vector<8x512xf32> -> vector<8x512xf32>
    %c0_15 = arith.constant 0 : index
    %c0_16 = arith.constant 0 : index
    %21 = vector.load %arg7[%c0_15, %c0_16] : memref<1x512xf32, #tpu.memory_space<vmem>>, vector<1x512xf32>
    %22 = vector.broadcast %21 : vector<1x512xf32> to vector<8x512xf32>
    %23 = arith.addf %20, %22 : vector<8x512xf32>
    %cst_17 = arith.constant 0.000000e+00 : f32
    %24 = vector.broadcast %cst_17 : f32 to vector<8x512xf32>
    %25 = arith.maximumf %23, %24 : vector<8x512xf32>
    %26 = arith.truncf %25 : vector<8x512xf32> to vector<8x512xbf16>
    %c0_18 = arith.constant 0 : index
    %c0_19 = arith.constant 0 : index
    %27 = vector.load %arg8[%c0_18, %c0_19] : memref<1x512xf32, #tpu.memory_space<vmem>>, vector<1x512xf32>
    %28 = vector.broadcast %27 : vector<1x512xf32> to vector<8x512xf32>
    %29 = arith.mulf %18, %28 : vector<8x512xf32>
    %cst_20 = arith.constant dense<0.000000e+00> : vector<8xf32>
    %30 = vector.multi_reduction <add>, %29, %cst_20 [1] : vector<8x512xf32> to vector<8xf32>
    %31 = vector.shape_cast %30 : vector<8xf32> to vector<8x1xf32>
    %c0_21 = arith.constant 0 : index
    %c0_22 = arith.constant 0 : index
    %32 = vector.load %arg9[%c0_21, %c0_22] : memref<1x1xf32, #tpu.memory_space<vmem>>, vector<1x1xf32>
    %33 = vector.broadcast %32 : vector<1x1xf32> to vector<8x1xf32>
    %34 = arith.addf %31, %33 : vector<8x1xf32>
    %c0_23 = arith.constant 0 : index
    %c0_24 = arith.constant 0 : index
    %35 = vector.load %arg10[%c0_23, %c0_24] : memref<512x8xbf16, #tpu.memory_space<vmem>>, vector<512x8xbf16>
    %cst_25 = arith.constant dense<0.000000e+00> : vector<8x8xf32>
    %36 = tpu.matmul %26, %35, %cst_25 {dimension_numbers = #tpu.dot_dimension_numbers<[1], [0], [0], [1], [0, 0, 1, 1], [], []>} : vector<8x512xbf16>, vector<512x8xbf16>, vector<8x8xf32> -> vector<8x8xf32>
    %c0_26 = arith.constant 0 : index
    %c0_27 = arith.constant 0 : index
    %37 = vector.load %arg11[%c0_26, %c0_27] : memref<1x8xf32, #tpu.memory_space<vmem>>, vector<1x8xf32>
    %38 = vector.broadcast %37 : vector<1x8xf32> to vector<8x8xf32>
    %39 = arith.addf %36, %38 : vector<8x8xf32>
    %cst_28 = arith.constant dense<0.000000e+00> : vector<8xf32>
    %40 = vector.multi_reduction <add>, %39, %cst_28 [1] : vector<8x8xf32> to vector<8xf32>
    %41 = vector.shape_cast %40 : vector<8xf32> to vector<8x1xf32>
    %cst_29 = arith.constant 8.000000e+00 : f32
    %42 = vector.broadcast %cst_29 : f32 to vector<8x1xf32>
    %43 = arith.divf %41, %42 : vector<8x1xf32>
    %44 = vector.broadcast %34 : vector<8x1xf32> to vector<8x8xf32>
    %45 = arith.addf %44, %39 : vector<8x8xf32>
    %46 = vector.broadcast %43 : vector<8x1xf32> to vector<8x8xf32>
    %47 = arith.subf %45, %46 : vector<8x8xf32>
    %c0_30 = arith.constant 0 : index
    %c0_31 = arith.constant 0 : index
    %48 = vector.load %arg12[%c0_30, %c0_31] : memref<8x8xf32, #tpu.memory_space<vmem>>, vector<8x8xf32>
    tpu.vector_store %arg12[%c0_30, %c0_31], %47 {strides = array<i32>} : memref<8x8xf32, #tpu.memory_space<vmem>>, vector<8x8xf32>,
    return
  }
  func.func @transform_0(%arg0: i32) -> (i32, i32) {
    %c0_i32 = arith.constant 0 : i32
    %c0_i32_0 = arith.constant 0 : i32
    return %arg0, %c0_i32 : i32, i32
  }
  func.func @transform_1(%arg0: i32) -> (i32, i32) {
    %c0_i32 = arith.constant 0 : i32
    %c0_i32_0 = arith.constant 0 : i32
    %c0_i32_1 = arith.constant 0 : i32
    return %c0_i32, %c0_i32_0 : i32, i32
  }
  func.func @transform_2(%arg0: i32) -> (i32, i32) {
    %c0_i32 = arith.constant 0 : i32
    %c0_i32_0 = arith.constant 0 : i32
    %c0_i32_1 = arith.constant 0 : i32
    return %c0_i32, %c0_i32_0 : i32, i32
  }
  func.func @transform_3(%arg0: i32) -> (i32, i32) {
    %c0_i32 = arith.constant 0 : i32
    %c0_i32_0 = arith.constant 0 : i32
    %c0_i32_1 = arith.constant 0 : i32
    return %c0_i32, %c0_i32_0 : i32, i32
  }
  func.func @transform_4(%arg0: i32) -> (i32, i32) {
    %c0_i32 = arith.constant 0 : i32
    %c0_i32_0 = arith.constant 0 : i32
    %c0_i32_1 = arith.constant 0 : i32
    return %c0_i32, %c0_i32_0 : i32, i32
  }
  func.func @transform_5(%arg0: i32) -> (i32, i32) {
    %c0_i32 = arith.constant 0 : i32
    %c0_i32_0 = arith.constant 0 : i32
    %c0_i32_1 = arith.constant 0 : i32
    return %c0_i32, %c0_i32_0 : i32, i32
  }
  func.func @transform_6(%arg0: i32) -> (i32, i32) {
    %c0_i32 = arith.constant 0 : i32
    %c0_i32_0 = arith.constant 0 : i32
    %c0_i32_1 = arith.constant 0 : i32
    return %c0_i32, %c0_i32_0 : i32, i32
  }
  func.func @transform_7(%arg0: i32) -> (i32, i32) {
    %c0_i32 = arith.constant 0 : i32
    %c0_i32_0 = arith.constant 0 : i32
    %c0_i32_1 = arith.constant 0 : i32
    return %c0_i32, %c0_i32_0 : i32, i32
  }
  func.func @transform_8(%arg0: i32) -> (i32, i32) {
    %c0_i32 = arith.constant 0 : i32
    %c0_i32_0 = arith.constant 0 : i32
    %c0_i32_1 = arith.constant 0 : i32
    return %c0_i32, %c0_i32_0 : i32, i32
  }
  func.func @transform_9(%arg0: i32) -> (i32, i32) {
    %c0_i32 = arith.constant 0 : i32
    %c0_i32_0 = arith.constant 0 : i32
    %c0_i32_1 = arith.constant 0 : i32
    return %c0_i32, %c0_i32_0 : i32, i32
  }
  func.func @transform_10(%arg0: i32) -> (i32, i32) {
    %c0_i32 = arith.constant 0 : i32
    %c0_i32_0 = arith.constant 0 : i32
    %c0_i32_1 = arith.constant 0 : i32
    return %c0_i32, %c0_i32_0 : i32, i32
  }
  func.func @transform_11(%arg0: i32) -> (i32, i32) {
    %c0_i32 = arith.constant 0 : i32
    %c0_i32_0 = arith.constant 0 : i32
    return %arg0, %c0_i32 : i32, i32
  }
}

</mosaic_0001>

<llo_original>
// kernel: tpu_custom_call.1
$region0: #{tpu_custom_call.1}
  #allocation0 [shape = 'u32[]', space=smem, size = 0x4, offset = 0x4, fixed_abs, tag = 'smem constant byte address 0x4 - core index']
  #allocation1 [shape = 'u32[144,128]{1,0:T(1,128)}', space=vmem, size = 0x12000, scoped, tag = 'internal scratch']
  #allocation2 [shape = 'f32[1,1]{1,0:T(1,128)S(1)}', space=vmem, size = 0x200, scoped, tag = 'scoped memory for tpu_custom_call.1']
  %s0 = inlined_call_operand.hbm [shape: f32[8,32], index: 0, kind: input, shape index: {}]
  %s1 = inlined_call_operand.hbm [shape: bf16[32,1024], index: 1, kind: input, shape index: {}]
  %s2 = inlined_call_operand.hbm [shape: f32[1,1024], index: 2, kind: input, shape index: {}]
  %s3 = inlined_call_operand.hbm [shape: bf16[512,512], index: 3, kind: input, shape index: {}]
  %s4 = inlined_call_operand.hbm [shape: f32[1,512], index: 4, kind: input, shape index: {}]
  %s5 = inlined_call_operand.hbm [shape: bf16[512,512], index: 5, kind: input, shape index: {}]
  %s6 = inlined_call_operand.hbm [shape: f32[1,512], index: 6, kind: input, shape index: {}]
  %s7 = inlined_call_operand.hbm [shape: f32[1,512], index: 7, kind: input, shape index: {}]
  %s8 = inlined_call_operand.<no memory space> [shape: f32[1,1], index: 8, kind: input, shape index: {}]
  %s9 = inlined_call_operand.hbm [shape: bf16[512,8], index: 9, kind: input, shape index: {}]
  %s10 = inlined_call_operand.hbm [shape: f32[1,8], index: 10, kind: input, shape index: {}]
  %s11 = inlined_call_operand.hbm [shape: f32[8,8], index: 11, kind: output, shape index: {}]
  %s12 = sld [smem:[#allocation0]]
  $region94: #{tpu_custom_call.1} parent=0
    _
  %s14 = ssub.s32 1, %s12
  %s15 = scalar_select 0, %s14, %s12
  %v16 = vstv %s8
  %17 = vst [vmem:[#allocation2] sm:$0x1] %v16
  $region1: #{tpu_custom_call.1} parent=0
    #allocation3 [shape = 'u8[4096]{0}', space=vmem, size = 0x1000, scoped, tag = 'input window, operand 0, single buffered']
    #allocation4 [shape = 's32[1]{0}', space=sflag, size = 0x4, scoped, tag = 'scoped memory for tpu_custom_call.1']
    #allocation5 [shape = 's32[1]{0}', space=sflag, size = 0x4, scoped, tag = 'scoped memory for tpu_custom_call.1']
    #allocation6 [shape = 'u8[65536]{0}', space=vmem, size = 0x10000, scoped, tag = 'input window, operand 1, single buffered']
    #allocation7 [shape = 's32[1]{0}', space=sflag, size = 0x4, scoped, tag = 'scoped memory for tpu_custom_call.1']
    #allocation8 [shape = 'u8[4096]{0}', space=vmem, size = 0x1000, scoped, tag = 'input window, operand 2, single buffered']
    #allocation9 [shape = 'u8[524288]{0}', space=vmem, size = 0x80000, scoped, tag = 'input window, operand 3, single buffered']
    #allocation10 [shape = 's32[1]{0}', space=sflag, size = 0x4, scoped, tag = 'scoped memory for tpu_custom_call.1']
    #allocation11 [shape = 'u8[2048]{0}', space=vmem, size = 0x800, scoped, tag = 'input window, operand 4, single buffered']
    #allocation12 [shape = 'u8[524288]{0}', space=vmem, size = 0x80000, scoped, tag = 'input window, operand 5, single buffered']
    #allocation13 [shape = 's32[1]{0}', space=sflag, size = 0x4, scoped, tag = 'scoped memory for tpu_custom_call.1']
    #allocation14 [shape = 'u8[2048]{0}', space=vmem, size = 0x800, scoped, tag = 'input window, operand 6, single buffered']
    #allocation15 [shape = 'u8[2048]{0}', space=vmem, size = 0x800, scoped, tag = 'input window, operand 7, single buffered']
    #allocation16 [shape = 's32[1]{0}', space=sflag, size = 0x4, scoped, tag = 'scoped memory for tpu_custom_call.1']
    #allocation17 [shape = 'u8[131072]{0}', space=vmem, size = 0x20000, scoped, tag = 'input window, operand 9, single buffered']
    #allocation18 [shape = 'u8[512]{0}', space=vmem, size = 0x400, scoped, tag = 'input window, operand 10, single buffered']
    #allocation19 [shape = 's32[1]{0}', space=sflag, size = 0x4, scoped, tag = 'scoped memory for tpu_custom_call.1']
    #allocation20 [shape = 'u8[4096]{0}', space=vmem, size = 0x1000, scoped, tag = 'output window, operand 0, single buffered']
    %18 = vsyncpa [#allocation4], 0
    %19 = vsyncpa [#allocation7], 0
    %20 = vsyncpa [#allocation10], 0
    %21 = vsyncpa [#allocation13], 0
    %22 = vsyncpa [#allocation16], 0
    %23 = vsyncpa [#allocation19], 0
    %24 = vsyncpa [#allocation5], 0
    // Predicated region
    $region2: #{tpu_custom_call.1} parent=1 // pred_check
      _
    $region3: #{tpu_custom_call.1} parent=1 // pred_check_branch
      %26 = sbr.rel (0) target = $region5
    $region4: #{tpu_custom_call.1} parent=1 // pred_region
      %s28 = ssub.s32 128, 128
      %29 = vsyncadd [#allocation4], %s28
      %s31 = sshll.u32 [#allocation3], 4
      %s32 = int_to_ptr.vmem [resolvable:$true] %s31
      %34 = dma.hbm_to_vmem [thread:$0]  %s0, 128, %s32, [#allocation4]
    $region5: #{tpu_custom_call.1} parent=1 // pred_fallthru
      _
    // Predicated region
    $region6: #{tpu_custom_call.1} parent=1 // pred_check
      _
    $region7: #{tpu_custom_call.1} parent=1 // pred_check_branch
      %36 = sbr.rel (0) target = $region9
    $region8: #{tpu_custom_call.1} parent=1 // pred_region
      %s38 = ssub.s32 2048, 2048
      %39 = vsyncadd [#allocation7], %s38
      %s40 = sshll.u32 [#allocation6], 4
      %s41 = int_to_ptr.vmem [resolvable:$true] %s40
      %46 = dma.hbm_to_vmem [thread:$0]  %s1, 2048, %s41, [#allocation7], 512, 512, 32
    $region9: #{tpu_custom_call.1} parent=1 // pred_fallthru
      _
    // Predicated region
    $region10: #{tpu_custom_call.1} parent=1 // pred_check
      _
    $region11: #{tpu_custom_call.1} parent=1 // pred_check_branch
      %48 = sbr.rel (0) target = $region13
    $region12: #{tpu_custom_call.1} parent=1 // pred_region
      %s50 = ssub.s32 128, 128
      %51 = vsyncadd [#allocation7], %s50
      %s53 = sshll.u32 [#allocation8], 4
      %s54 = int_to_ptr.vmem [resolvable:$true] %s53
      %56 = dma.hbm_to_vmem [thread:$0]  %s2, 128, %s54, [#allocation7]
    $region13: #{tpu_custom_call.1} parent=1 // pred_fallthru
      _
    // Predicated region
    $region14: #{tpu_custom_call.1} parent=1 // pred_check
      _
    $region15: #{tpu_custom_call.1} parent=1 // pred_check_branch
      %58 = sbr.rel (0) target = $region17
    $region16: #{tpu_custom_call.1} parent=1 // pred_region
      %s60 = ssub.s32 16384, 16384
      %61 = vsyncadd [#allocation10], %s60
      %s62 = sshll.u32 [#allocation9], 4
      %s63 = int_to_ptr.vmem [resolvable:$true] %s62
      %68 = dma.hbm_to_vmem [thread:$0]  %s3, 16384, %s63, [#allocation10], 256, 256, 16
    $region17: #{tpu_custom_call.1} parent=1 // pred_fallthru
      _
    // Predicated region
    $region18: #{tpu_custom_call.1} parent=1 // pred_check
      _
    $region19: #{tpu_custom_call.1} parent=1 // pred_check_branch
      %70 = sbr.rel (0) target = $region21
    $region20: #{tpu_custom_call.1} parent=1 // pred_region
      %s72 = ssub.s32 64, 64
      %73 = vsyncadd [#allocation10], %s72
      %s75 = sshll.u32 [#allocation11], 4
      %s76 = int_to_ptr.vmem [resolvable:$true] %s75
      %78 = dma.hbm_to_vmem [thread:$0]  %s4, 64, %s76, [#allocation10]
    $region21: #{tpu_custom_call.1} parent=1 // pred_fallthru
      _
    // Predicated region
    $region22: #{tpu_custom_call.1} parent=1 // pred_check
      _
    $region23: #{tpu_custom_call.1} parent=1 // pred_check_branch
      %80 = sbr.rel (0) target = $region25
    $region24: #{tpu_custom_call.1} parent=1 // pred_region
      %s82 = ssub.s32 16384, 16384
      %83 = vsyncadd [#allocation13], %s82
      %s84 = sshll.u32 [#allocation12], 4
      %s85 = int_to_ptr.vmem [resolvable:$true] %s84
      %90 = dma.hbm_to_vmem [thread:$0]  %s5, 16384, %s85, [#allocation13], 256, 256, 16
    $region25: #{tpu_custom_call.1} parent=1 // pred_fallthru
      _
    // Predicated region
    $region26: #{tpu_custom_call.1} parent=1 // pred_check
      _
    $region27: #{tpu_custom_call.1} parent=1 // pred_check_branch
      %92 = sbr.rel (0) target = $region29
    $region28: #{tpu_custom_call.1} parent=1 // pred_region
      %s94 = ssub.s32 64, 64
      %95 = vsyncadd [#allocation13], %s94
      %s97 = sshll.u32 [#allocation14], 4
      %s98 = int_to_ptr.vmem [resolvable:$true] %s97
      %100 = dma.hbm_to_vmem [thread:$0]  %s6, 64, %s98, [#allocation13]
    $region29: #{tpu_custom_call.1} parent=1 // pred_fallthru
      _
    // Predicated region
    $region30: #{tpu_custom_call.1} parent=1 // pred_check
      _
    $region31: #{tpu_custom_call.1} parent=1 // pred_check_branch
      %102 = sbr.rel (0) target = $region33
    $region32: #{tpu_custom_call.1} parent=1 // pred_region
      %s104 = ssub.s32 64, 64
      %105 = vsyncadd [#allocation16], %s104
      %s107 = sshll.u32 [#allocation15], 4
      %s108 = int_to_ptr.vmem [resolvable:$true] %s107
      %110 = dma.hbm_to_vmem [thread:$0]  %s7, 64, %s108, [#allocation16]
    $region33: #{tpu_custom_call.1} parent=1 // pred_fallthru
      _
    // Predicated region
    $region34: #{tpu_custom_call.1} parent=1 // pred_check
      _
    $region35: #{tpu_custom_call.1} parent=1 // pred_check_branch
      %112 = sbr.rel (0) target = $region37
    $region36: #{tpu_custom_call.1} parent=1 // pred_region
      _
    $region37: #{tpu_custom_call.1} parent=1 // pred_fallthru
      _
    // Predicated region
    $region38: #{tpu_custom_call.1} parent=1 // pred_check
      _
    $region39: #{tpu_custom_call.1} parent=1 // pred_check_branch
      %114 = sbr.rel (0) target = $region41
    $region40: #{tpu_custom_call.1} parent=1 // pred_region
      %s116 = ssub.s32 4096, 4096
      %117 = vsyncadd [#allocation16], %s116
      %s118 = sshll.u32 [#allocation17], 4
      %s119 = int_to_ptr.vmem [resolvable:$true] %s118
      %124 = dma.hbm_to_vmem [thread:$0]  %s9, 4096, %s119, [#allocation16], 64, 64, 4
    $region41: #{tpu_custom_call.1} parent=1 // pred_fallthru
      _
    // Predicated region
    $region42: #{tpu_custom_call.1} parent=1 // pred_check
      _
    $region43: #{tpu_custom_call.1} parent=1 // pred_check_branch
      %126 = sbr.rel (0) target = $region45
    $region44: #{tpu_custom_call.1} parent=1 // pred_region
      %s128 = ssub.s32 16, 16
      %129 = vsyncadd [#allocation19], %s128
      %s131 = sshll.u32 [#allocation18], 4
      %s132 = int_to_ptr.vmem [resolvable:$true] %s131
      %134 = dma.hbm_to_vmem [thread:$0]  %s10, 16, %s132, [#allocation19]
    $region45: #{tpu_custom_call.1} parent=1 // pred_fallthru
      _
    // Predicated region
    $region46: #{tpu_custom_call.1} parent=1 // pred_check
      _
    $region47: #{tpu_custom_call.1} parent=1 // pred_check_branch
      %136 = sbr.rel (0) target = $region49
    $region48: #{tpu_custom_call.1} parent=1 // pred_region
      %137 = dma.done [#allocation4], 128
    $region49: #{tpu_custom_call.1} parent=1 // pred_fallthru
      _
    // Predicated region
    $region50: #{tpu_custom_call.1} parent=1 // pred_check
      _
    $region51: #{tpu_custom_call.1} parent=1 // pred_check_branch
      %139 = sbr.rel (0) target = $region53
    $region52: #{tpu_custom_call.1} parent=1 // pred_region
      %140 = dma.done [#allocation7], 2048
    $region53: #{tpu_custom_call.1} parent=1 // pred_fallthru
      _
    // Predicated region
    $region54: #{tpu_custom_call.1} parent=1 // pred_check
      _
    $region55: #{tpu_custom_call.1} parent=1 // pred_check_branch
      %142 = sbr.rel (0) target = $region57
    $region56: #{tpu_custom_call.1} parent=1 // pred_region
      %143 = dma.done [#allocation7], 128
    $region57: #{tpu_custom_call.1} parent=1 // pred_fallthru
      _
    // Predicated region
    $region58: #{tpu_custom_call.1} parent=1 // pred_check
      _
    $region59: #{tpu_custom_call.1} parent=1 // pred_check_branch
      %145 = sbr.rel (0) target = $region61
    $region60: #{tpu_custom_call.1} parent=1 // pred_region
      %146 = dma.done [#allocation10], 16384
    $region61: #{tpu_custom_call.1} parent=1 // pred_fallthru
      _
    // Predicated region
    $region62: #{tpu_custom_call.1} parent=1 // pred_check
      _
    $region63: #{tpu_custom_call.1} parent=1 // pred_check_branch
      %148 = sbr.rel (0) target = $region65
    $region64: #{tpu_custom_call.1} parent=1 // pred_region
      %149 = dma.done [#allocation10], 64
    $region65: #{tpu_custom_call.1} parent=1 // pred_fallthru
      _
    // Predicated region
    $region66: #{tpu_custom_call.1} parent=1 // pred_check
      _
    $region67: #{tpu_custom_call.1} parent=1 // pred_check_branch
      %151 = sbr.rel (0) target = $region69
    $region68: #{tpu_custom_call.1} parent=1 // pred_region
      %152 = dma.done [#allocation13], 16384
    $region69: #{tpu_custom_call.1} parent=1 // pred_fallthru
      _
    // Predicated region
    $region70: #{tpu_custom_call.1} parent=1 // pred_check
      _
    $region71: #{tpu_custom_call.1} parent=1 // pred_check_branch
      %154 = sbr.rel (0) target = $region73
    $region72: #{tpu_custom_call.1} parent=1 // pred_region
      %155 = dma.done [#allocation13], 64
    $region73: #{tpu_custom_call.1} parent=1 // pred_fallthru
      _
    // Predicated region
    $region74: #{tpu_custom_call.1} parent=1 // pred_check
      _
    $region75: #{tpu_custom_call.1} parent=1 // pred_check_branch
      %157 = sbr.rel (0) target = $region77
    $region76: #{tpu_custom_call.1} parent=1 // pred_region
      %158 = dma.done [#allocation16], 64
    $region77: #{tpu_custom_call.1} parent=1 // pred_fallthru
      _
    // Predicated region
    $region78: #{tpu_custom_call.1} parent=1 // pred_check
      _
    $region79: #{tpu_custom_call.1} parent=1 // pred_check_branch
      %160 = sbr.rel (0) target = $region81
    $region80: #{tpu_custom_call.1} parent=1 // pred_region
      %161 = dma.done [#allocation16], 4096
    $region81: #{tpu_custom_call.1} parent=1 // pred_fallthru
      _
    // Predicated region
    $region82: #{tpu_custom_call.1} parent=1 // pred_check
      _
    $region83: #{tpu_custom_call.1} parent=1 // pred_check_branch
      %163 = sbr.rel (0) target = $region85
    $region84: #{tpu_custom_call.1} parent=1 // pred_region
      %164 = dma.done [#allocation19], 16
    $region85: #{tpu_custom_call.1} parent=1 // pred_fallthru
      _
    %v166 = vld [vmem:[#allocation3] sm:$0xff]
    %v167 = vpack.c.bf16 %v166, %v166
    %v168 = vld [vmem:[#allocation6] sm:$0xff]
    %v169 = vld [vmem:[#allocation6 + $0x8] sm:$0xff]
    %v170 = vld [vmem:[#allocation6 + $0x10] sm:$0xff]
    %v171 = vld [vmem:[#allocation6 + $0x18] sm:$0xff]
    %v172 = vld [vmem:[#allocation6 + $0x20] sm:$0xff]
    %v173 = vld [vmem:[#allocation6 + $0x28] sm:$0xff]
    %v174 = vld [vmem:[#allocation6 + $0x30] sm:$0xff]
    %v175 = vld [vmem:[#allocation6 + $0x38] sm:$0xff]
    %v176 = vld [vmem:[#allocation6 + $0x40] sm:$0xff]
    %v177 = vld [vmem:[#allocation6 + $0x48] sm:$0xff]
    %v178 = vld [vmem:[#allocation6 + $0x50] sm:$0xff]
    %v179 = vld [vmem:[#allocation6 + $0x58] sm:$0xff]
    %v180 = vld [vmem:[#allocation6 + $0x60] sm:$0xff]
    %v181 = vld [vmem:[#allocation6 + $0x68] sm:$0xff]
    %v182 = vld [vmem:[#allocation6 + $0x70] sm:$0xff]
    %v183 = vld [vmem:[#allocation6 + $0x78] sm:$0xff]
    %v184 = vld [vmem:[#allocation8] sm:$0xff]
    %v186 = vlaneseq
    %v187 = vshrl.u32 %v186, 7
    %v188 = vsub.s32 0, %v187
    %v189 = vrot.slane %v184, %v188
    %v190 = vlaneseq
    %v191 = vshrl.u32 %v190, 7
    %v192 = vsub.s32 1, %v191
    %v193 = vrot.slane %v184, %v192
    %v194 = vlaneseq
    %v195 = vshrl.u32 %v194, 7
    %v196 = vsub.s32 2, %v195
    %v197 = vrot.slane %v184, %v196
    %v198 = vlaneseq
    %v199 = vshrl.u32 %v198, 7
    %v200 = vsub.s32 3, %v199
    %v201 = vrot.slane %v184, %v200
    %v202 = vlaneseq
    %v203 = vshrl.u32 %v202, 7
    %v204 = vsub.s32 4, %v203
    %v205 = vrot.slane %v184, %v204
    %v206 = vlaneseq
    %v207 = vshrl.u32 %v206, 7
    %v208 = vsub.s32 5, %v207
    %v209 = vrot.slane %v184, %v208
    %v210 = vlaneseq
    %v211 = vshrl.u32 %v210, 7
    %v212 = vsub.s32 6, %v211
    %v213 = vrot.slane %v184, %v212
    %v214 = vlaneseq
    %v215 = vshrl.u32 %v214, 7
    %v216 = vsub.s32 7, %v215
    %v217 = vrot.slane %v184, %v216
    %v242 = vunpack.c.l.b16 %v168
    %v243 = vunpack.c.h.b16 %v168
    %v244 = vunpack.c.l.b16 %v169
    %v245 = vunpack.c.h.b16 %v169
    %v246 = vunpack.c.l.b16 %v170
    %v247 = vunpack.c.h.b16 %v170
    %v248 = vunpack.c.l.b16 %v171
    %v249 = vunpack.c.h.b16 %v171
    %v250 = vunpack.c.l.b16 %v172
    %v251 = vunpack.c.h.b16 %v172
    %v252 = vunpack.c.l.b16 %v173
    %v253 = vunpack.c.h.b16 %v173
    %v254 = vunpack.c.l.b16 %v174
    %v255 = vunpack.c.h.b16 %v174
    %v256 = vunpack.c.l.b16 %v175
    %v257 = vunpack.c.h.b16 %v175
    %v258 = vunpack.c.l.b16 %v176
    %v259 = vunpack.c.h.b16 %v176
    %v260 = vunpack.c.l.b16 %v177
    %v261 = vunpack.c.h.b16 %v177
    %v262 = vunpack.c.l.b16 %v178
    %v263 = vunpack.c.h.b16 %v178
    %v264 = vunpack.c.l.b16 %v179
    %v265 = vunpack.c.h.b16 %v179
    %v266 = vunpack.c.l.b16 %v180
    %v267 = vunpack.c.h.b16 %v180
    %v268 = vunpack.c.l.b16 %v181
    %v269 = vunpack.c.h.b16 %v181
    %v270 = vunpack.c.l.b16 %v182
    %v271 = vunpack.c.h.b16 %v182
    %v272 = vunpack.c.l.b16 %v183
    %v273 = vunpack.c.h.b16 %v183
    %v274 = vpack.c.b16 %v250, %v242
    %v275 = vpack.c.b16 %v251, %v243
    %v276 = vpack.c.b16 %v252, %v244
    %v277 = vpack.c.b16 %v253, %v245
    %v278 = vpack.c.b16 %v254, %v246
    %v279 = vpack.c.b16 %v255, %v247
    %v280 = vpack.c.b16 %v256, %v248
    %v281 = vpack.c.b16 %v257, %v249
    %v282 = vpack.c.b16 %v266, %v258
    %v283 = vpack.c.b16 %v267, %v259
    %v284 = vpack.c.b16 %v268, %v260
    %v285 = vpack.c.b16 %v269, %v261
    %v286 = vpack.c.b16 %v270, %v262
    %v287 = vpack.c.b16 %v271, %v263
    %v288 = vpack.c.b16 %v272, %v264
    %v289 = vpack.c.b16 %v273, %v265
    %vm306 = vcmask 261120
    %v308 = vsel %vm306, %v167, 0
    %310 = vmatprep.subr.bf16.mxu0 %v275
    %311 = vmatpush1.bf16.msra.mxu0 %v274
    %312 = vmatprep.subr.bf16.mxu0 %v283
    %313 = vmatpush1.bf16.msra.mxu0 %v282
    %314 = vmatprep.subr.bf16.mxu0 0
    %315 = vmatpush1.bf16.msra.mxu0 0
    %316 = vmatprep.subr.bf16.mxu0 0
    %317 = vmatpush1.bf16.msra.mxu0 0
    %318 = vmatprep.subr.bf16.mxu0 0
    %319 = vmatpush1.bf16.msra.mxu0 0
    %320 = vmatprep.subr.bf16.mxu0 0
    %321 = vmatpush1.bf16.msra.mxu0 0
    %322 = vmatprep.subr.bf16.mxu0 0
    %323 = vmatpush1.bf16.msra.mxu0 0
    %324 = vmatprep.subr.bf16.mxu0 0
    %325 = vmatpush1.bf16.msra.mxu0 0
    %326 = vmatprep.subr.bf16.mxu0 0
    %327 = vmatpush1.bf16.msra.mxu0 0
    %328 = vmatprep.subr.bf16.mxu0 0
    %329 = vmatpush1.bf16.msra.mxu0 0
    %330 = vmatprep.subr.bf16.mxu0 0
    %331 = vmatpush1.bf16.msra.mxu0 0
    %332 = vmatprep.subr.bf16.mxu0 0
    %333 = vmatpush1.bf16.msra.mxu0 0
    %334 = vmatprep.subr.bf16.mxu0 0
    %335 = vmatpush1.bf16.msra.mxu0 0
    %336 = vmatprep.subr.bf16.mxu0 0
    %337 = vmatpush1.bf16.msra.mxu0 0
    %338 = vmatprep.subr.bf16.mxu0 0
    %339 = vmatpush1.bf16.msra.mxu0 0
    %340 = vmatprep.subr.bf16.mxu0 0
    %341 = vmatpush1.bf16.msra.mxu0 0
    %342 = vmatprep.mubr.bf16.mxu0 0
    %343 = vmatmul.mubr.bf16.gmra.mrb[0].mxu0 %v308
    %v344 = vpop.f32.mrb[0].mxu0
    %v345 = vadd.f32 %v189, %v344
    %v346 = vpop.f32.mrb[0].mxu0
    %v347 = vadd.f32 %v193, %v346
    %v348 = vpop.f32.mrb[0].mxu0
    %v349 = vpop.f32.mrb[0].mxu0
    %350 = vdwg.mxu0
    %351 = vmatprep.subr.bf16.mxu0 %v277
    %352 = vmatpush1.bf16.msra.mxu0 %v276
    %353 = vmatprep.subr.bf16.mxu0 %v285
    %354 = vmatpush1.bf16.msra.mxu0 %v284
    %355 = vmatprep.subr.bf16.mxu0 0
    %356 = vmatpush1.bf16.msra.mxu0 0
    %357 = vmatprep.subr.bf16.mxu0 0
    %358 = vmatpush1.bf16.msra.mxu0 0
    %359 = vmatprep.subr.bf16.mxu0 0
    %360 = vmatpush1.bf16.msra.mxu0 0
    %361 = vmatprep.subr.bf16.mxu0 0
    %362 = vmatpush1.bf16.msra.mxu0 0
    %363 = vmatprep.subr.bf16.mxu0 0
    %364 = vmatpush1.bf16.msra.mxu0 0
    %365 = vmatprep.subr.bf16.mxu0 0
    %366 = vmatpush1.bf16.msra.mxu0 0
    %367 = vmatprep.subr.bf16.mxu0 0
    %368 = vmatpush1.bf16.msra.mxu0 0
    %369 = vmatprep.subr.bf16.mxu0 0
    %370 = vmatpush1.bf16.msra.mxu0 0
    %371 = vmatprep.subr.bf16.mxu0 0
    %372 = vmatpush1.bf16.msra.mxu0 0
    %373 = vmatprep.subr.bf16.mxu0 0
    %374 = vmatpush1.bf16.msra.mxu0 0
    %375 = vmatprep.subr.bf16.mxu0 0
    %376 = vmatpush1.bf16.msra.mxu0 0
    %377 = vmatprep.subr.bf16.mxu0 0
    %378 = vmatpush1.bf16.msra.mxu0 0
    %379 = vmatprep.subr.bf16.mxu0 0
    %380 = vmatpush1.bf16.msra.mxu0 0
    %381 = vmatprep.subr.bf16.mxu0 0
    %382 = vmatpush1.bf16.msra.mxu0 0
    %383 = vmatprep.mubr.bf16.mxu0 0
    %384 = vmatmul.mubr.bf16.gmra.mrb[0].mxu0 %v308
    %v385 = vpop.f32.mrb[0].mxu0
    %v386 = vadd.f32 %v197, %v385
    %v387 = vpop.f32.mrb[0].mxu0
    %v388 = vadd.f32 %v201, %v387
    %v389 = vpop.f32.mrb[0].mxu0
    %v390 = vpop.f32.mrb[0].mxu0
    %391 = vdwg.mxu0
    %392 = vmatprep.subr.bf16.mxu0 %v279
    %393 = vmatpush1.bf16.msra.mxu0 %v278
    %394 = vmatprep.subr.bf16.mxu0 %v287
    %395 = vmatpush1.bf16.msra.mxu0 %v286
    %396 = vmatprep.subr.bf16.mxu0 0
    %397 = vmatpush1.bf16.msra.mxu0 0
    %398 = vmatprep.subr.bf16.mxu0 0
    %399 = vmatpush1.bf16.msra.mxu0 0
    %400 = vmatprep.subr.bf16.mxu0 0
    %401 = vmatpush1.bf16.msra.mxu0 0
    %402 = vmatprep.subr.bf16.mxu0 0
    %403 = vmatpush1.bf16.msra.mxu0 0
    %404 = vmatprep.subr.bf16.mxu0 0
    %405 = vmatpush1.bf16.msra.mxu0 0
    %406 = vmatprep.subr.bf16.mxu0 0
    %407 = vmatpush1.bf16.msra.mxu0 0
    %408 = vmatprep.subr.bf16.mxu0 0
    %409 = vmatpush1.bf16.msra.mxu0 0
    %410 = vmatprep.subr.bf16.mxu0 0
    %411 = vmatpush1.bf16.msra.mxu0 0
    %412 = vmatprep.subr.bf16.mxu0 0
    %413 = vmatpush1.bf16.msra.mxu0 0
    %414 = vmatprep.subr.bf16.mxu0 0
    %415 = vmatpush1.bf16.msra.mxu0 0
    %416 = vmatprep.subr.bf16.mxu0 0
    %417 = vmatpush1.bf16.msra.mxu0 0
    %418 = vmatprep.subr.bf16.mxu0 0
    %419 = vmatpush1.bf16.msra.mxu0 0
    %420 = vmatprep.subr.bf16.mxu0 0
    %421 = vmatpush1.bf16.msra.mxu0 0
    %422 = vmatprep.subr.bf16.mxu0 0
    %423 = vmatpush1.bf16.msra.mxu0 0
    %424 = vmatprep.mubr.bf16.mxu0 0
    %425 = vmatmul.mubr.bf16.gmra.mrb[0].mxu0 %v308
    %v426 = vpop.f32.mrb[0].mxu0
    %v427 = vadd.f32 %v205, %v426
    %v428 = vpop.f32.mrb[0].mxu0
    %v429 = vadd.f32 %v209, %v428
    %v430 = vpop.f32.mrb[0].mxu0
    %v431 = vpop.f32.mrb[0].mxu0
    %432 = vdwg.mxu0
    %433 = vmatprep.subr.bf16.mxu0 %v281
    %434 = vmatpush1.bf16.msra.mxu0 %v280
    %435 = vmatprep.subr.bf16.mxu0 %v289
    %436 = vmatpush1.bf16.msra.mxu0 %v288
    %437 = vmatprep.subr.bf16.mxu0 0
    %438 = vmatpush1.bf16.msra.mxu0 0
    %439 = vmatprep.subr.bf16.mxu0 0
    %440 = vmatpush1.bf16.msra.mxu0 0
    %441 = vmatprep.subr.bf16.mxu0 0
    %442 = vmatpush1.bf16.msra.mxu0 0
    %443 = vmatprep.subr.bf16.mxu0 0
    %444 = vmatpush1.bf16.msra.mxu0 0
    %445 = vmatprep.subr.bf16.mxu0 0
    %446 = vmatpush1.bf16.msra.mxu0 0
    %447 = vmatprep.subr.bf16.mxu0 0
    %448 = vmatpush1.bf16.msra.mxu0 0
    %449 = vmatprep.subr.bf16.mxu0 0
    %450 = vmatpush1.bf16.msra.mxu0 0
    %451 = vmatprep.subr.bf16.mxu0 0
    %452 = vmatpush1.bf16.msra.mxu0 0
    %453 = vmatprep.subr.bf16.mxu0 0
    %454 = vmatpush1.bf16.msra.mxu0 0
    %455 = vmatprep.subr.bf16.mxu0 0
    %456 = vmatpush1.bf16.msra.mxu0 0
    %457 = vmatprep.subr.bf16.mxu0 0
    %458 = vmatpush1.bf16.msra.mxu0 0
    %459 = vmatprep.subr.bf16.mxu0 0
    %460 = vmatpush1.bf16.msra.mxu0 0
    %461 = vmatprep.subr.bf16.mxu0 0
    %462 = vmatpush1.bf16.msra.mxu0 0
    %463 = vmatprep.subr.bf16.mxu0 0
    %464 = vmatpush1.bf16.msra.mxu0 0
    %465 = vmatprep.mubr.bf16.mxu0 0
    %466 = vmatmul.mubr.bf16.gmra.mrb[0].mxu0 %v308
    %v467 = vpop.f32.mrb[0].mxu0
    %v468 = vadd.f32 %v213, %v467
    %v469 = vpop.f32.mrb[0].mxu0
    %v470 = vadd.f32 %v217, %v469
    %v471 = vpop.f32.mrb[0].mxu0
    %v472 = vpop.f32.mrb[0].mxu0
    %473 = vdwg.mxu0
    %v474 = vmax.f32 %v345, 0.0
    %v475 = vmax.f32 %v347, 0.0
    %v476 = vmax.f32 %v386, 0.0
    %v477 = vmax.f32 %v388, 0.0
    %v478 = vmax.f32 %v427, 0.0
    %v479 = vmax.f32 %v429, 0.0
    %v480 = vmax.f32 %v468, 0.0
    %v481 = vmax.f32 %v470, 0.0
    %v482 = vpack.c.bf16 %v474, %v474
    %v483 = vpack.c.bf16 %v475, %v475
    %v484 = vpack.c.bf16 %v476, %v476
    %v485 = vpack.c.bf16 %v477, %v477
    %v486 = vpack.c.bf16 %v478, %v478
    %v487 = vpack.c.bf16 %v479, %v479
    %v488 = vpack.c.bf16 %v480, %v480
    %v489 = vpack.c.bf16 %v481, %v481
    %v490 = vld [vmem:[#allocation9] sm:$0xff]
    %v491 = vld [vmem:[#allocation9 + $0x8] sm:$0xff]
    %v492 = vld [vmem:[#allocation9 + $0x10] sm:$0xff]
    %v493 = vld [vmem:[#allocation9 + $0x18] sm:$0xff]
    %v494 = vld [vmem:[#allocation9 + $0x20] sm:$0xff]
    %v495 = vld [vmem:[#allocation9 + $0x28] sm:$0xff]
    %v496 = vld [vmem:[#allocation9 + $0x30] sm:$0xff]
    %v497 = vld [vmem:[#allocation9 + $0x38] sm:$0xff]
    %v498 = vld [vmem:[#allocation9 + $0x40] sm:$0xff]
    %v499 = vld [vmem:[#allocation9 + $0x48] sm:$0xff]
    %v500 = vld [vmem:[#allocation9 + $0x50] sm:$0xff]
    %v501 = vld [vmem:[#allocation9 + $0x58] sm:$0xff]
    %v502 = vld [vmem:[#allocation9 + $0x60] sm:$0xff]
    %v503 = vld [vmem:[#allocation9 + $0x68] sm:$0xff]
    %v504 = vld [vmem:[#allocation9 + $0x70] sm:$0xff]
    %v505 = vld [vmem:[#allocation9 + $0x78] sm:$0xff]
    %v506 = vld [vmem:[#allocation9 + $0x80] sm:$0xff]
    %v507 = vld [vmem:[#allocation9 + $0x88] sm:$0xff]
    %v508 = vld [vmem:[#allocation9 + $0x90] sm:$0xff]
    %v509 = vld [vmem:[#allocation9 + $0x98] sm:$0xff]
    %v510 = vld [vmem:[#allocation9 + $0xa0] sm:$0xff]
    %v511 = vld [vmem:[#allocation9 + $0xa8] sm:$0xff]
    %v512 = vld [vmem:[#allocation9 + $0xb0] sm:$0xff]
    %v513 = vld [vmem:[#allocation9 + $0xb8] sm:$0xff]
    %v514 = vld [vmem:[#allocation9 + $0xc0] sm:$0xff]
    %v515 = vld [vmem:[#allocation9 + $0xc8] sm:$0xff]
    %v516 = vld [vmem:[#allocation9 + $0xd0] sm:$0xff]
    %v517 = vld [vmem:[#allocation9 + $0xd8] sm:$0xff]
    %v518 = vld [vmem:[#allocation9 + $0xe0] sm:$0xff]
    %v519 = vld [vmem:[#allocation9 + $0xe8] sm:$0xff]
    %v520 = vld [vmem:[#allocation9 + $0xf0] sm:$0xff]
    %v521 = vld [vmem:[#allocation9 + $0xf8] sm:$0xff]
    %v522 = vld [vmem:[#allocation9 + $0x100] sm:$0xff]
    %v523 = vld [vmem:[#allocation9 + $0x108] sm:$0xff]
    %v524 = vld [vmem:[#allocation9 + $0x110] sm:$0xff]
    %v525 = vld [vmem:[#allocation9 + $0x118] sm:$0xff]
    %v526 = vld [vmem:[#allocation9 + $0x120] sm:$0xff]
    %v527 = vld [vmem:[#allocation9 + $0x128] sm:$0xff]
    %v528 = vld [vmem:[#allocation9 + $0x130] sm:$0xff]
    %v529 = vld [vmem:[#allocation9 + $0x138] sm:$0xff]
    %v530 = vld [vmem:[#allocation9 + $0x140] sm:$0xff]
    %v531 = vld [vmem:[#allocation9 + $0x148] sm:$0xff]
    %v532 = vld [vmem:[#allocation9 + $0x150] sm:$0xff]
    %v533 = vld [vmem:[#allocation9 + $0x158] sm:$0xff]
    %v534 = vld [vmem:[#allocation9 + $0x160] sm:$0xff]
    %v535 = vld [vmem:[#allocation9 + $0x168] sm:$0xff]
    %v536 = vld [vmem:[#allocation9 + $0x170] sm:$0xff]
    %v537 = vld [vmem:[#allocation9 + $0x178] sm:$0xff]
    %v538 = vld [vmem:[#allocation9 + $0x180] sm:$0xff]
    %v539 = vld [vmem:[#allocation9 + $0x188] sm:$0xff]
    %v540 = vld [vmem:[#allocation9 + $0x190] sm:$0xff]
    %v541 = vld [vmem:[#allocation9 + $0x198] sm:$0xff]
    %v542 = vld [vmem:[#allocation9 + $0x1a0] sm:$0xff]
    %v543 = vld [vmem:[#allocation9 + $0x1a8] sm:$0xff]
    %v544 = vld [vmem:[#allocation9 + $0x1b0] sm:$0xff]
    %v545 = vld [vmem:[#allocation9 + $0x1b8] sm:$0xff]
    %v546 = vld [vmem:[#allocation9 + $0x1c0] sm:$0xff]
    %v547 = vld [vmem:[#allocation9 + $0x1c8] sm:$0xff]
    %v548 = vld [vmem:[#allocation9 + $0x1d0] sm:$0xff]
    %v549 = vld [vmem:[#allocation9 + $0x1d8] sm:$0xff]
    %v550 = vld [vmem:[#allocation9 + $0x1e0] sm:$0xff]
    %v551 = vld [vmem:[#allocation9 + $0x1e8] sm:$0xff]
    %v552 = vld [vmem:[#allocation9 + $0x1f0] sm:$0xff]
    %v553 = vld [vmem:[#allocation9 + $0x1f8] sm:$0xff]
    %v554 = vld [vmem:[#allocation9 + $0x200] sm:$0xff]
    %v555 = vld [vmem:[#allocation9 + $0x208] sm:$0xff]
    %v556 = vld [vmem:[#allocation9 + $0x210] sm:$0xff]
    %v557 = vld [vmem:[#allocation9 + $0x218] sm:$0xff]
    %v558 = vld [vmem:[#allocation9 + $0x220] sm:$0xff]
    %v559 = vld [vmem:[#allocation9 + $0x228] sm:$0xff]
    %v560 = vld [vmem:[#allocation9 + $0x230] sm:$0xff]
    %v561 = vld [vmem:[#allocation9 + $0x238] sm:$0xff]
    %v562 = vld [vmem:[#allocation9 + $0x240] sm:$0xff]
    %v563 = vld [vmem:[#allocation9 + $0x248] sm:$0xff]
    %v564 = vld [vmem:[#allocation9 + $0x250] sm:$0xff]
    %v565 = vld [vmem:[#allocation9 + $0x258] sm:$0xff]
    %v566 = vld [vmem:[#allocation9 + $0x260] sm:$0xff]
    %v567 = vld [vmem:[#allocation9 + $0x268] sm:$0xff]
    %v568 = vld [vmem:[#allocation9 + $0x270] sm:$0xff]
    %v569 = vld [vmem:[#allocation9 + $0x278] sm:$0xff]
    %v570 = vld [vmem:[#allocation9 + $0x280] sm:$0xff]
    %v571 = vld [vmem:[#allocation9 + $0x288] sm:$0xff]
    %v572 = vld [vmem:[#allocation9 + $0x290] sm:$0xff]
    %v573 = vld [vmem:[#allocation9 + $0x298] sm:$0xff]
    %v574 = vld [vmem:[#allocation9 + $0x2a0] sm:$0xff]
    %v575 = vld [vmem:[#allocation9 + $0x2a8] sm:$0xff]
    %v576 = vld [vmem:[#allocation9 + $0x2b0] sm:$0xff]
    %v577 = vld [vmem:[#allocation9 + $0x2b8] sm:$0xff]
    %v578 = vld [vmem:[#allocation9 + $0x2c0] sm:$0xff]
    %v579 = vld [vmem:[#allocation9 + $0x2c8] sm:$0xff]
    %v580 = vld [vmem:[#allocation9 + $0x2d0] sm:$0xff]
    %v581 = vld [vmem:[#allocation9 + $0x2d8] sm:$0xff]
    %v582 = vld [vmem:[#allocation9 + $0x2e0] sm:$0xff]
    %v583 = vld [vmem:[#allocation9 + $0x2e8] sm:$0xff]
    %v584 = vld [vmem:[#allocation9 + $0x2f0] sm:$0xff]
    %v585 = vld [vmem:[#allocation9 + $0x2f8] sm:$0xff]
    %v586 = vld [vmem:[#allocation9 + $0x300] sm:$0xff]
    %v587 = vld [vmem:[#allocation9 + $0x308] sm:$0xff]
    %v588 = vld [vmem:[#allocation9 + $0x310] sm:$0xff]
    %v589 = vld [vmem:[#allocation9 + $0x318] sm:$0xff]
    %v590 = vld [vmem:[#allocation9 + $0x320] sm:$0xff]
    %v591 = vld [vmem:[#allocation9 + $0x328] sm:$0xff]
    %v592 = vld [vmem:[#allocation9 + $0x330] sm:$0xff]
    %v593 = vld [vmem:[#allocation9 + $0x338] sm:$0xff]
    %v594 = vld [vmem:[#allocation9 + $0x340] sm:$0xff]
    %v595 = vld [vmem:[#allocation9 + $0x348] sm:$0xff]
    %v596 = vld [vmem:[#allocation9 + $0x350] sm:$0xff]
    %v597 = vld [vmem:[#allocation9 + $0x358] sm:$0xff]
    %v598 = vld [vmem:[#allocation9 + $0x360] sm:$0xff]
    %v599 = vld [vmem:[#allocation9 + $0x368] sm:$0xff]
    %v600 = vld [vmem:[#allocation9 + $0x370] sm:$0xff]
    %v601 = vld [vmem:[#allocation9 + $0x378] sm:$0xff]
    %v602 = vld [vmem:[#allocation9 + $0x380] sm:$0xff]
    %v603 = vld [vmem:[#allocation9 + $0x388] sm:$0xff]
    %v604 = vld [vmem:[#allocation9 + $0x390] sm:$0xff]
    %v605 = vld [vmem:[#allocation9 + $0x398] sm:$0xff]
    %v606 = vld [vmem:[#allocation9 + $0x3a0] sm:$0xff]
    %v607 = vld [vmem:[#allocation9 + $0x3a8] sm:$0xff]
    %v608 = vld [vmem:[#allocation9 + $0x3b0] sm:$0xff]
    %v609 = vld [vmem:[#allocation9 + $0x3b8] sm:$0xff]
    %v610 = vld [vmem:[#allocation9 + $0x3c0] sm:$0xff]
    %v611 = vld [vmem:[#allocation9 + $0x3c8] sm:$0xff]
    %v612 = vld [vmem:[#allocation9 + $0x3d0] sm:$0xff]
    %v613 = vld [vmem:[#allocation9 + $0x3d8] sm:$0xff]
    %v614 = vld [vmem:[#allocation9 + $0x3e0] sm:$0xff]
    %v615 = vld [vmem:[#allocation9 + $0x3e8] sm:$0xff]
    %v616 = vld [vmem:[#allocation9 + $0x3f0] sm:$0xff]
    %v617 = vld [vmem:[#allocation9 + $0x3f8] sm:$0xff]
    %v618 = vld [vmem:[#allocation11] sm:$0xf]
    %v620 = vlaneseq
    %v621 = vshrl.u32 %v620, 7
    %v622 = vsub.s32 0, %v621
    %v623 = vrot.slane %v618, %v622
    %v624 = vlaneseq
    %v625 = vshrl.u32 %v624, 7
    %v626 = vsub.s32 1, %v625
    %v627 = vrot.slane %v618, %v626
    %v628 = vlaneseq
    %v629 = vshrl.u32 %v628, 7
    %v630 = vsub.s32 2, %v629
    %v631 = vrot.slane %v618, %v630
    %v632 = vlaneseq
    %v633 = vshrl.u32 %v632, 7
    %v634 = vsub.s32 3, %v633
    %v635 = vrot.slane %v618, %v634
    %v768 = vunpack.c.l.b16 %v490
    %v769 = vunpack.c.h.b16 %v490
    %v770 = vunpack.c.l.b16 %v491
    %v771 = vunpack.c.h.b16 %v491
    %v772 = vunpack.c.l.b16 %v492
    %v773 = vunpack.c.h.b16 %v492
    %v774 = vunpack.c.l.b16 %v493
    %v775 = vunpack.c.h.b16 %v493
    %v776 = vunpack.c.l.b16 %v494
    %v777 = vunpack.c.h.b16 %v494
    %v778 = vunpack.c.l.b16 %v495
    %v779 = vunpack.c.h.b16 %v495
    %v780 = vunpack.c.l.b16 %v496
    %v781 = vunpack.c.h.b16 %v496
    %v782 = vunpack.c.l.b16 %v497
    %v783 = vunpack.c.h.b16 %v497
    %v784 = vunpack.c.l.b16 %v498
    %v785 = vunpack.c.h.b16 %v498
    %v786 = vunpack.c.l.b16 %v499
    %v787 = vunpack.c.h.b16 %v499
    %v788 = vunpack.c.l.b16 %v500
    %v789 = vunpack.c.h.b16 %v500
    %v790 = vunpack.c.l.b16 %v501
    %v791 = vunpack.c.h.b16 %v501
    %v792 = vunpack.c.l.b16 %v502
    %v793 = vunpack.c.h.b16 %v502
    %v794 = vunpack.c.l.b16 %v503
    %v795 = vunpack.c.h.b16 %v503
    %v796 = vunpack.c.l.b16 %v504
    %v797 = vunpack.c.h.b16 %v504
    %v798 = vunpack.c.l.b16 %v505
    %v799 = vunpack.c.h.b16 %v505
    %v800 = vunpack.c.l.b16 %v506
    %v801 = vunpack.c.h.b16 %v506
    %v802 = vunpack.c.l.b16 %v507
    %v803 = vunpack.c.h.b16 %v507
    %v804 = vunpack.c.l.b16 %v508
    %v805 = vunpack.c.h.b16 %v508
    %v806 = vunpack.c.l.b16 %v509
    %v807 = vunpack.c.h.b16 %v509
    %v808 = vunpack.c.l.b16 %v510
    %v809 = vunpack.c.h.b16 %v510
    %v810 = vunpack.c.l.b16 %v511
    %v811 = vunpack.c.h.b16 %v511
    %v812 = vunpack.c.l.b16 %v512
    %v813 = vunpack.c.h.b16 %v512
    %v814 = vunpack.c.l.b16 %v513
    %v815 = vunpack.c.h.b16 %v513
    %v816 = vunpack.c.l.b16 %v514
    %v817 = vunpack.c.h.b16 %v514
    %v818 = vunpack.c.l.b16 %v515
    %v819 = vunpack.c.h.b16 %v515
    %v820 = vunpack.c.l.b16 %v516
    %v821 = vunpack.c.h.b16 %v516
    %v822 = vunpack.c.l.b16 %v517
    %v823 = vunpack.c.h.b16 %v517
    %v824 = vunpack.c.l.b16 %v518
    %v825 = vunpack.c.h.b16 %v518
    %v826 = vunpack.c.l.b16 %v519
    %v827 = vunpack.c.h.b16 %v519
    %v828 = vunpack.c.l.b16 %v520
    %v829 = vunpack.c.h.b16 %v520
    %v830 = vunpack.c.l.b16 %v521
    %v831 = vunpack.c.h.b16 %v521
    %v832 = vunpack.c.l.b16 %v522
    %v833 = vunpack.c.h.b16 %v522
    %v834 = vunpack.c.l.b16 %v523
    %v835 = vunpack.c.h.b16 %v523
    %v836 = vunpack.c.l.b16 %v524
    %v837 = vunpack.c.h.b16 %v524
    %v838 = vunpack.c.l.b16 %v525
    %v839 = vunpack.c.h.b16 %v525
    %v840 = vunpack.c.l.b16 %v526
    %v841 = vunpack.c.h.b16 %v526
    %v842 = vunpack.c.l.b16 %v527
    %v843 = vunpack.c.h.b16 %v527
    %v844 = vunpack.c.l.b16 %v528
    %v845 = vunpack.c.h.b16 %v528
    %v846 = vunpack.c.l.b16 %v529
    %v847 = vunpack.c.h.b16 %v529
    %v848 = vunpack.c.l.b16 %v530
    %v849 = vunpack.c.h.b16 %v530
    %v850 = vunpack.c.l.b16 %v531
    %v851 = vunpack.c.h.b16 %v531
    %v852 = vunpack.c.l.b16 %v532
    %v853 = vunpack.c.h.b16 %v532
    %v854 = vunpack.c.l.b16 %v533
    %v855 = vunpack.c.h.b16 %v533
    %v856 = vunpack.c.l.b16 %v534
    %v857 = vunpack.c.h.b16 %v534
    %v858 = vunpack.c.l.b16 %v535
    %v859 = vunpack.c.h.b16 %v535
    %v860 = vunpack.c.l.b16 %v536
    %v861 = vunpack.c.h.b16 %v536
    %v862 = vunpack.c.l.b16 %v537
    %v863 = vunpack.c.h.b16 %v537
    %v864 = vunpack.c.l.b16 %v538
    %v865 = vunpack.c.h.b16 %v538
    %v866 = vunpack.c.l.b16 %v539
    %v867 = vunpack.c.h.b16 %v539
    %v868 = vunpack.c.l.b16 %v540
    %v869 = vunpack.c.h.b16 %v540
    %v870 = vunpack.c.l.b16 %v541
    %v871 = vunpack.c.h.b16 %v541
    %v872 = vunpack.c.l.b16 %v542
    %v873 = vunpack.c.h.b16 %v542
    %v874 = vunpack.c.l.b16 %v543
    %v875 = vunpack.c.h.b16 %v543
    %v876 = vunpack.c.l.b16 %v544
    %v877 = vunpack.c.h.b16 %v544
    %v878 = vunpack.c.l.b16 %v545
    %v879 = vunpack.c.h.b16 %v545
    %v880 = vunpack.c.l.b16 %v546
    %v881 = vunpack.c.h.b16 %v546
    %v882 = vunpack.c.l.b16 %v547
    %v883 = vunpack.c.h.b16 %v547
    %v884 = vunpack.c.l.b16 %v548
    %v885 = vunpack.c.h.b16 %v548
    %v886 = vunpack.c.l.b16 %v549
    %v887 = vunpack.c.h.b16 %v549
    %v888 = vunpack.c.l.b16 %v550
    %v889 = vunpack.c.h.b16 %v550
    %v890 = vunpack.c.l.b16 %v551
    %v891 = vunpack.c.h.b16 %v551
    %v892 = vunpack.c.l.b16 %v552
    %v893 = vunpack.c.h.b16 %v552
    %v894 = vunpack.c.l.b16 %v553
    %v895 = vunpack.c.h.b16 %v553
    %v896 = vunpack.c.l.b16 %v554
    %v897 = vunpack.c.h.b16 %v554
    %v898 = vunpack.c.l.b16 %v555
    %v899 = vunpack.c.h.b16 %v555
    %v900 = vunpack.c.l.b16 %v556
    %v901 = vunpack.c.h.b16 %v556
    %v902 = vunpack.c.l.b16 %v557
    %v903 = vunpack.c.h.b16 %v557
    %v904 = vunpack.c.l.b16 %v558
    %v905 = vunpack.c.h.b16 %v558
    %v906 = vunpack.c.l.b16 %v559
    %v907 = vunpack.c.h.b16 %v559
    %v908 = vunpack.c.l.b16 %v560
    %v909 = vunpack.c.h.b16 %v560
    %v910 = vunpack.c.l.b16 %v561
    %v911 = vunpack.c.h.b16 %v561
    %v912 = vunpack.c.l.b16 %v562
    %v913 = vunpack.c.h.b16 %v562
    %v914 = vunpack.c.l.b16 %v563
    %v915 = vunpack.c.h.b16 %v563
    %v916 = vunpack.c.l.b16 %v564
    %v917 = vunpack.c.h.b16 %v564
    %v918 = vunpack.c.l.b16 %v565
    %v919 = vunpack.c.h.b16 %v565
    %v920 = vunpack.c.l.b16 %v566
    %v921 = vunpack.c.h.b16 %v566
    %v922 = vunpack.c.l.b16 %v567
    %v923 = vunpack.c.h.b16 %v567
    %v924 = vunpack.c.l.b16 %v568
    %v925 = vunpack.c.h.b16 %v568
    %v926 = vunpack.c.l.b16 %v569
    %v927 = vunpack.c.h.b16 %v569
    %v928 = vunpack.c.l.b16 %v570
    %v929 = vunpack.c.h.b16 %v570
    %v930 = vunpack.c.l.b16 %v571
    %v931 = vunpack.c.h.b16 %v571
    %v932 = vunpack.c.l.b16 %v572
    %v933 = vunpack.c.h.b16 %v572
    %v934 = vunpack.c.l.b16 %v573
    %v935 = vunpack.c.h.b16 %v573
    %v936 = vunpack.c.l.b16 %v574
    %v937 = vunpack.c.h.b16 %v574
    %v938 = vunpack.c.l.b16 %v575
    %v939 = vunpack.c.h.b16 %v575
    %v940 = vunpack.c.l.b16 %v576
    %v941 = vunpack.c.h.b16 %v576
    %v942 = vunpack.c.l.b16 %v577
    %v943 = vunpack.c.h.b16 %v577
    %v944 = vunpack.c.l.b16 %v578
    %v945 = vunpack.c.h.b16 %v578
    %v946 = vunpack.c.l.b16 %v579
    %v947 = vunpack.c.h.b16 %v579
    %v948 = vunpack.c.l.b16 %v580
    %v949 = vunpack.c.h.b16 %v580
    %v950 = vunpack.c.l.b16 %v581
    %v951 = vunpack.c.h.b16 %v581
    %v952 = vunpack.c.l.b16 %v582
    %v953 = vunpack.c.h.b16 %v582
    %v954 = vunpack.c.l.b16 %v583
    %v955 = vunpack.c.h.b16 %v583
    %v956 = vunpack.c.l.b16 %v584
    %v957 = vunpack.c.h.b16 %v584
    %v958 = vunpack.c.l.b16 %v585
    %v959 = vunpack.c.h.b16 %v585
    %v960 = vunpack.c.l.b16 %v586
    %v961 = vunpack.c.h.b16 %v586
    %v962 = vunpack.c.l.b16 %v587
    %v963 = vunpack.c.h.b16 %v587
    %v964 = vunpack.c.l.b16 %v588
    %v965 = vunpack.c.h.b16 %v588
    %v966 = vunpack.c.l.b16 %v589
    %v967 = vunpack.c.h.b16 %v589
    %v968 = vunpack.c.l.b16 %v590
    %v969 = vunpack.c.h.b16 %v590
    %v970 = vunpack.c.l.b16 %v591
    %v971 = vunpack.c.h.b16 %v591
    %v972 = vunpack.c.l.b16 %v592
    %v973 = vunpack.c.h.b16 %v592
    %v974 = vunpack.c.l.b16 %v593
    %v975 = vunpack.c.h.b16 %v593
    %v976 = vunpack.c.l.b16 %v594
    %v977 = vunpack.c.h.b16 %v594
    %v978 = vunpack.c.l.b16 %v595
    %v979 = vunpack.c.h.b16 %v595
    %v980 = vunpack.c.l.b16 %v596
    %v981 = vunpack.c.h.b16 %v596
    %v982 = vunpack.c.l.b16 %v597
    %v983 = vunpack.c.h.b16 %v597
    %v984 = vunpack.c.l.b16 %v598
    %v985 = vunpack.c.h.b16 %v598
    %v986 = vunpack.c.l.b16 %v599
    %v987 = vunpack.c.h.b16 %v599
    %v988 = vunpack.c.l.b16 %v600
    %v989 = vunpack.c.h.b16 %v600
    %v990 = vunpack.c.l.b16 %v601
    %v991 = vunpack.c.h.b16 %v601
    %v992 = vunpack.c.l.b16 %v602
    %v993 = vunpack.c.h.b16 %v602
    %v994 = vunpack.c.l.b16 %v603
    %v995 = vunpack.c.h.b16 %v603
    %v996 = vunpack.c.l.b16 %v604
    %v997 = vunpack.c.h.b16 %v604
    %v998 = vunpack.c.l.b16 %v605
    %v999 = vunpack.c.h.b16 %v605
    %v1000 = vunpack.c.l.b16 %v606
    %v1001 = vunpack.c.h.b16 %v606
    %v1002 = vunpack.c.l.b16 %v607
    %v1003 = vunpack.c.h.b16 %v607
    %v1004 = vunpack.c.l.b16 %v608
    %v1005 = vunpack.c.h.b16 %v608
    %v1006 = vunpack.c.l.b16 %v609
    %v1007 = vunpack.c.h.b16 %v609
    %v1008 = vunpack.c.l.b16 %v610
    %v1009 = vunpack.c.h.b16 %v610
    %v1010 = vunpack.c.l.b16 %v611
    %v1011 = vunpack.c.h.b16 %v611
    %v1012 = vunpack.c.l.b16 %v612
    %v1013 = vunpack.c.h.b16 %v612
    %v1014 = vunpack.c.l.b16 %v613
    %v1015 = vunpack.c.h.b16 %v613
    %v1016 = vunpack.c.l.b16 %v614
    %v1017 = vunpack.c.h.b16 %v614
    %v1018 = vunpack.c.l.b16 %v615
    %v1019 = vunpack.c.h.b16 %v615
    %v1020 = vunpack.c.l.b16 %v616
    %v1021 = vunpack.c.h.b16 %v616
    %v1022 = vunpack.c.l.b16 %v617
    %v1023 = vunpack.c.h.b16 %v617
    %v1024 = vpack.c.b16 %v772, %v768
    %v1025 = vpack.c.b16 %v773, %v769
    %v1026 = vpack.c.b16 %v774, %v770
    %v1027 = vpack.c.b16 %v775, %v771
    %v1028 = vpack.c.b16 %v780, %v776
    %v1029 = vpack.c.b16 %v781, %v777
    %v1030 = vpack.c.b16 %v782, %v778
    %v1031 = vpack.c.b16 %v783, %v779
    %v1032 = vpack.c.b16 %v788, %v784
    %v1033 = vpack.c.b16 %v789, %v785
    %v1034 = vpack.c.b16 %v790, %v786
    %v1035 = vpack.c.b16 %v791, %v787
    %v1036 = vpack.c.b16 %v796, %v792
    %v1037 = vpack.c.b16 %v797, %v793
    %v1038 = vpack.c.b16 %v798, %v794
    %v1039 = vpack.c.b16 %v799, %v795
    %v1040 = vpack.c.b16 %v804, %v800
    %v1041 = vpack.c.b16 %v805, %v801
    %v1042 = vpack.c.b16 %v806, %v802
    %v1043 = vpack.c.b16 %v807, %v803
    %v1044 = vpack.c.b16 %v812, %v808
    %v1045 = vpack.c.b16 %v813, %v809
    %v1046 = vpack.c.b16 %v814, %v810
    %v1047 = vpack.c.b16 %v815, %v811
    %v1048 = vpack.c.b16 %v820, %v816
    %v1049 = vpack.c.b16 %v821, %v817
    %v1050 = vpack.c.b16 %v822, %v818
    %v1051 = vpack.c.b16 %v823, %v819
    %v1052 = vpack.c.b16 %v828, %v824
    %v1053 = vpack.c.b16 %v829, %v825
    %v1054 = vpack.c.b16 %v830, %v826
    %v1055 = vpack.c.b16 %v831, %v827
    %v1056 = vpack.c.b16 %v836, %v832
    %v1057 = vpack.c.b16 %v837, %v833
    %v1058 = vpack.c.b16 %v838, %v834
    %v1059 = vpack.c.b16 %v839, %v835
    %v1060 = vpack.c.b16 %v844, %v840
    %v1061 = vpack.c.b16 %v845, %v841
    %v1062 = vpack.c.b16 %v846, %v842
    %v1063 = vpack.c.b16 %v847, %v843
    %v1064 = vpack.c.b16 %v852, %v848
    %v1065 = vpack.c.b16 %v853, %v849
    %v1066 = vpack.c.b16 %v854, %v850
    %v1067 = vpack.c.b16 %v855, %v851
    %v1068 = vpack.c.b16 %v860, %v856
    %v1069 = vpack.c.b16 %v861, %v857
    %v1070 = vpack.c.b16 %v862, %v858
    %v1071 = vpack.c.b16 %v863, %v859
    %v1072 = vpack.c.b16 %v868, %v864
    %v1073 = vpack.c.b16 %v869, %v865
    %v1074 = vpack.c.b16 %v870, %v866
    %v1075 = vpack.c.b16 %v871, %v867
    %v1076 = vpack.c.b16 %v876, %v872
    %v1077 = vpack.c.b16 %v877, %v873
    %v1078 = vpack.c.b16 %v878, %v874
    %v1079 = vpack.c.b16 %v879, %v875
    %v1080 = vpack.c.b16 %v884, %v880
    %v1081 = vpack.c.b16 %v885, %v881
    %v1082 = vpack.c.b16 %v886, %v882
    %v1083 = vpack.c.b16 %v887, %v883
    %v1084 = vpack.c.b16 %v892, %v888
    %v1085 = vpack.c.b16 %v893, %v889
    %v1086 = vpack.c.b16 %v894, %v890
    %v1087 = vpack.c.b16 %v895, %v891
    %v1088 = vpack.c.b16 %v900, %v896
    %v1089 = vpack.c.b16 %v901, %v897
    %v1090 = vpack.c.b16 %v902, %v898
    %v1091 = vpack.c.b16 %v903, %v899
    %v1092 = vpack.c.b16 %v908, %v904
    %v1093 = vpack.c.b16 %v909, %v905
    %v1094 = vpack.c.b16 %v910, %v906
    %v1095 = vpack.c.b16 %v911, %v907
    %v1096 = vpack.c.b16 %v916, %v912
    %v1097 = vpack.c.b16 %v917, %v913
    %v1098 = vpack.c.b16 %v918, %v914
    %v1099 = vpack.c.b16 %v919, %v915
    %v1100 = vpack.c.b16 %v924, %v920
    %v1101 = vpack.c.b16 %v925, %v921
    %v1102 = vpack.c.b16 %v926, %v922
    %v1103 = vpack.c.b16 %v927, %v923
    %v1104 = vpack.c.b16 %v932, %v928
    %v1105 = vpack.c.b16 %v933, %v929
    %v1106 = vpack.c.b16 %v934, %v930
    %v1107 = vpack.c.b16 %v935, %v931
    %v1108 = vpack.c.b16 %v940, %v936
    %v1109 = vpack.c.b16 %v941, %v937
    %v1110 = vpack.c.b16 %v942, %v938
    %v1111 = vpack.c.b16 %v943, %v939
    %v1112 = vpack.c.b16 %v948, %v944
    %v1113 = vpack.c.b16 %v949, %v945
    %v1114 = vpack.c.b16 %v950, %v946
    %v1115 = vpack.c.b16 %v951, %v947
    %v1116 = vpack.c.b16 %v956, %v952
    %v1117 = vpack.c.b16 %v957, %v953
    %v1118 = vpack.c.b16 %v958, %v954
    %v1119 = vpack.c.b16 %v959, %v955
    %v1120 = vpack.c.b16 %v964, %v960
    %v1121 = vpack.c.b16 %v965, %v961
    %v1122 = vpack.c.b16 %v966, %v962
    %v1123 = vpack.c.b16 %v967, %v963
    %v1124 = vpack.c.b16 %v972, %v968
    %v1125 = vpack.c.b16 %v973, %v969
    %v1126 = vpack.c.b16 %v974, %v970
    %v1127 = vpack.c.b16 %v975, %v971
    %v1128 = vpack.c.b16 %v980, %v976
    %v1129 = vpack.c.b16 %v981, %v977
    %v1130 = vpack.c.b16 %v982, %v978
    %v1131 = vpack.c.b16 %v983, %v979
    %v1132 = vpack.c.b16 %v988, %v984
    %v1133 = vpack.c.b16 %v989, %v985
    %v1134 = vpack.c.b16 %v990, %v986
    %v1135 = vpack.c.b16 %v991, %v987
    %v1136 = vpack.c.b16 %v996, %v992
    %v1137 = vpack.c.b16 %v997, %v993
    %v1138 = vpack.c.b16 %v998, %v994
    %v1139 = vpack.c.b16 %v999, %v995
    %v1140 = vpack.c.b16 %v1004, %v1000
    %v1141 = vpack.c.b16 %v1005, %v1001
    %v1142 = vpack.c.b16 %v1006, %v1002
    %v1143 = vpack.c.b16 %v1007, %v1003
    %v1144 = vpack.c.b16 %v1012, %v1008
    %v1145 = vpack.c.b16 %v1013, %v1009
    %v1146 = vpack.c.b16 %v1014, %v1010
    %v1147 = vpack.c.b16 %v1015, %v1011
    %v1148 = vpack.c.b16 %v1020, %v1016
    %v1149 = vpack.c.b16 %v1021, %v1017
    %v1150 = vpack.c.b16 %v1022, %v1018
    %v1151 = vpack.c.b16 %v1023, %v1019
    %1280 = vmatprep.subr.bf16.mxu0 %v1025
    %1281 = vmatpush1.bf16.msra.mxu0 %v1024
    %1282 = vmatprep.subr.bf16.mxu0 %v1029
    %1283 = vmatpush1.bf16.msra.mxu0 %v1028
    %1284 = vmatprep.subr.bf16.mxu0 %v1033
    %1285 = vmatpush1.bf16.msra.mxu0 %v1032
    %1286 = vmatprep.subr.bf16.mxu0 %v1037
    %1287 = vmatpush1.bf16.msra.mxu0 %v1036
    %1288 = vmatprep.subr.bf16.mxu0 %v1041
    %1289 = vmatpush1.bf16.msra.mxu0 %v1040
    %1290 = vmatprep.subr.bf16.mxu0 %v1045
    %1291 = vmatpush1.bf16.msra.mxu0 %v1044
    %1292 = vmatprep.subr.bf16.mxu0 %v1049
    %1293 = vmatpush1.bf16.msra.mxu0 %v1048
    %1294 = vmatprep.subr.bf16.mxu0 %v1053
    %1295 = vmatpush1.bf16.msra.mxu0 %v1052
    %1296 = vmatprep.subr.bf16.mxu0 %v1057
    %1297 = vmatpush1.bf16.msra.mxu0 %v1056
    %1298 = vmatprep.subr.bf16.mxu0 %v1061
    %1299 = vmatpush1.bf16.msra.mxu0 %v1060
    %1300 = vmatprep.subr.bf16.mxu0 %v1065
    %1301 = vmatpush1.bf16.msra.mxu0 %v1064
    %1302 = vmatprep.subr.bf16.mxu0 %v1069
    %1303 = vmatpush1.bf16.msra.mxu0 %v1068
    %1304 = vmatprep.subr.bf16.mxu0 %v1073
    %1305 = vmatpush1.bf16.msra.mxu0 %v1072
    %1306 = vmatprep.subr.bf16.mxu0 %v1077
    %1307 = vmatpush1.bf16.msra.mxu0 %v1076
    %1308 = vmatprep.subr.bf16.mxu0 %v1081
    %1309 = vmatpush1.bf16.msra.mxu0 %v1080
    %1310 = vmatprep.subr.bf16.mxu0 %v1085
    %1311 = vmatpush1.bf16.msra.mxu0 %v1084
    %1312 = vmatprep.mubr.bf16.mxu0 %v483
    %1313 = vmatmul.mubr.bf16.gmra.mrb[0].mxu0 %v482
    %v1314 = vpop.f32.mrb[0].mxu0
    %v1315 = vadd.f32 %v623, %v1314
    %v1316 = vpop.f32.mrb[0].mxu0
    %v1317 = vadd.f32 %v627, %v1316
    %v1318 = vpop.f32.mrb[0].mxu0
    %v1319 = vpop.f32.mrb[0].mxu0
    %1320 = vdwg.mxu0
    %1321 = vmatprep.subr.bf16.mxu0 %v1089
    %1322 = vmatpush1.bf16.msra.mxu0 %v1088
    %1323 = vmatprep.subr.bf16.mxu0 %v1093
    %1324 = vmatpush1.bf16.msra.mxu0 %v1092
    %1325 = vmatprep.subr.bf16.mxu0 %v1097
    %1326 = vmatpush1.bf16.msra.mxu0 %v1096
    %1327 = vmatprep.subr.bf16.mxu0 %v1101
    %1328 = vmatpush1.bf16.msra.mxu0 %v1100
    %1329 = vmatprep.subr.bf16.mxu0 %v1105
    %1330 = vmatpush1.bf16.msra.mxu0 %v1104
    %1331 = vmatprep.subr.bf16.mxu0 %v1109
    %1332 = vmatpush1.bf16.msra.mxu0 %v1108
    %1333 = vmatprep.subr.bf16.mxu0 %v1113
    %1334 = vmatpush1.bf16.msra.mxu0 %v1112
    %1335 = vmatprep.subr.bf16.mxu0 %v1117
    %1336 = vmatpush1.bf16.msra.mxu0 %v1116
    %1337 = vmatprep.subr.bf16.mxu0 %v1121
    %1338 = vmatpush1.bf16.msra.mxu0 %v1120
    %1339 = vmatprep.subr.bf16.mxu0 %v1125
    %1340 = vmatpush1.bf16.msra.mxu0 %v1124
    %1341 = vmatprep.subr.bf16.mxu0 %v1129
    %1342 = vmatpush1.bf16.msra.mxu0 %v1128
    %1343 = vmatprep.subr.bf16.mxu0 %v1133
    %1344 = vmatpush1.bf16.msra.mxu0 %v1132
    %1345 = vmatprep.subr.bf16.mxu0 %v1137
    %1346 = vmatpush1.bf16.msra.mxu0 %v1136
    %1347 = vmatprep.subr.bf16.mxu0 %v1141
    %1348 = vmatpush1.bf16.msra.mxu0 %v1140
    %1349 = vmatprep.subr.bf16.mxu0 %v1145
    %1350 = vmatpush1.bf16.msra.mxu0 %v1144
    %1351 = vmatprep.subr.bf16.mxu0 %v1149
    %1352 = vmatpush1.bf16.msra.mxu0 %v1148
    %1353 = vmatprep.mubr.bf16.mxu0 %v485
    %1354 = vmatmul.mubr.bf16.gmra.mrb[0].mxu0 %v484
    %v1355 = vpop.f32.mrb[0].mxu0
    %v1356 = vadd.f32 %v1315, %v1355
    %v1357 = vpop.f32.mrb[0].mxu0
    %v1358 = vadd.f32 %v1317, %v1357
    %v1359 = vpop.f32.mrb[0].mxu0
    %v1360 = vpop.f32.mrb[0].mxu0
    %1361 = vdwg.mxu0
    %1362 = vmatprep.subr.bf16.mxu0 %v1027
    %1363 = vmatpush1.bf16.msra.mxu0 %v1026
    %1364 = vmatprep.subr.bf16.mxu0 %v1031
    %1365 = vmatpush1.bf16.msra.mxu0 %v1030
    %1366 = vmatprep.subr.bf16.mxu0 %v1035
    %1367 = vmatpush1.bf16.msra.mxu0 %v1034
    %1368 = vmatprep.subr.bf16.mxu0 %v1039
    %1369 = vmatpush1.bf16.msra.mxu0 %v1038
    %1370 = vmatprep.subr.bf16.mxu0 %v1043
    %1371 = vmatpush1.bf16.msra.mxu0 %v1042
    %1372 = vmatprep.subr.bf16.mxu0 %v1047
    %1373 = vmatpush1.bf16.msra.mxu0 %v1046
    %1374 = vmatprep.subr.bf16.mxu0 %v1051
    %1375 = vmatpush1.bf16.msra.mxu0 %v1050
    %1376 = vmatprep.subr.bf16.mxu0 %v1055
    %1377 = vmatpush1.bf16.msra.mxu0 %v1054
    %1378 = vmatprep.subr.bf16.mxu0 %v1059
    %1379 = vmatpush1.bf16.msra.mxu0 %v1058
    %1380 = vmatprep.subr.bf16.mxu0 %v1063
    %1381 = vmatpush1.bf16.msra.mxu0 %v1062
    %1382 = vmatprep.subr.bf16.mxu0 %v1067
    %1383 = vmatpush1.bf16.msra.mxu0 %v1066
    %1384 = vmatprep.subr.bf16.mxu0 %v1071
    %1385 = vmatpush1.bf16.msra.mxu0 %v1070
    %1386 = vmatprep.subr.bf16.mxu0 %v1075
    %1387 = vmatpush1.bf16.msra.mxu0 %v1074
    %1388 = vmatprep.subr.bf16.mxu0 %v1079
    %1389 = vmatpush1.bf16.msra.mxu0 %v1078
    %1390 = vmatprep.subr.bf16.mxu0 %v1083
    %1391 = vmatpush1.bf16.msra.mxu0 %v1082
    %1392 = vmatprep.subr.bf16.mxu0 %v1087
    %1393 = vmatpush1.bf16.msra.mxu0 %v1086
    %1394 = vmatprep.mubr.bf16.mxu0 %v483
    %1395 = vmatmul.mubr.bf16.gmra.mrb[0].mxu0 %v482
    %v1396 = vpop.f32.mrb[0].mxu0
    %v1397 = vadd.f32 %v631, %v1396
    %v1398 = vpop.f32.mrb[0].mxu0
    %v1399 = vadd.f32 %v635, %v1398
    %v1400 = vpop.f32.mrb[0].mxu0
    %v1401 = vpop.f32.mrb[0].mxu0
    %1402 = vdwg.mxu0
    %1403 = vmatprep.subr.bf16.mxu0 %v1091
    %1404 = vmatpush1.bf16.msra.mxu0 %v1090
    %1405 = vmatprep.subr.bf16.mxu0 %v1095
    %1406 = vmatpush1.bf16.msra.mxu0 %v1094
    %1407 = vmatprep.subr.bf16.mxu0 %v1099
    %1408 = vmatpush1.bf16.msra.mxu0 %v1098
    %1409 = vmatprep.subr.bf16.mxu0 %v1103
    %1410 = vmatpush1.bf16.msra.mxu0 %v1102
    %1411 = vmatprep.subr.bf16.mxu0 %v1107
    %1412 = vmatpush1.bf16.msra.mxu0 %v1106
    %1413 = vmatprep.subr.bf16.mxu0 %v1111
    %1414 = vmatpush1.bf16.msra.mxu0 %v1110
    %1415 = vmatprep.subr.bf16.mxu0 %v1115
    %1416 = vmatpush1.bf16.msra.mxu0 %v1114
    %1417 = vmatprep.subr.bf16.mxu0 %v1119
    %1418 = vmatpush1.bf16.msra.mxu0 %v1118
    %1419 = vmatprep.subr.bf16.mxu0 %v1123
    %1420 = vmatpush1.bf16.msra.mxu0 %v1122
    %1421 = vmatprep.subr.bf16.mxu0 %v1127
    %1422 = vmatpush1.bf16.msra.mxu0 %v1126
    %1423 = vmatprep.subr.bf16.mxu0 %v1131
    %1424 = vmatpush1.bf16.msra.mxu0 %v1130
    %1425 = vmatprep.subr.bf16.mxu0 %v1135
    %1426 = vmatpush1.bf16.msra.mxu0 %v1134
    %1427 = vmatprep.subr.bf16.mxu0 %v1139
    %1428 = vmatpush1.bf16.msra.mxu0 %v1138
    %1429 = vmatprep.subr.bf16.mxu0 %v1143
    %1430 = vmatpush1.bf16.msra.mxu0 %v1142
    %1431 = vmatprep.subr.bf16.mxu0 %v1147
    %1432 = vmatpush1.bf16.msra.mxu0 %v1146
    %1433 = vmatprep.subr.bf16.mxu0 %v1151
    %1434 = vmatpush1.bf16.msra.mxu0 %v1150
    %1435 = vmatprep.mubr.bf16.mxu0 %v485
    %1436 = vmatmul.mubr.bf16.gmra.mrb[0].mxu0 %v484
    %v1437 = vpop.f32.mrb[0].mxu0
    %v1438 = vadd.f32 %v1397, %v1437
    %v1439 = vpop.f32.mrb[0].mxu0
    %v1440 = vadd.f32 %v1399, %v1439
    %v1441 = vpop.f32.mrb[0].mxu0
    %v1442 = vpop.f32.mrb[0].mxu0
    %1443 = vdwg.mxu0
    %v1444 = vmax.f32 %v1356, 0.0
    %v1445 = vmax.f32 %v1358, 0.0
    %v1446 = vmax.f32 %v1438, 0.0
    %v1447 = vmax.f32 %v1440, 0.0
    %v1448 = vld [vmem:[#allocation12] sm:$0xff]
    %v1449 = vld [vmem:[#allocation12 + $0x8] sm:$0xff]
    %v1450 = vld [vmem:[#allocation12 + $0x10] sm:$0xff]
    %v1451 = vld [vmem:[#allocation12 + $0x18] sm:$0xff]
    %v1452 = vld [vmem:[#allocation12 + $0x20] sm:$0xff]
    %v1453 = vld [vmem:[#allocation12 + $0x28] sm:$0xff]
    %v1454 = vld [vmem:[#allocation12 + $0x30] sm:$0xff]
    %v1455 = vld [vmem:[#allocation12 + $0x38] sm:$0xff]
    %v1456 = vld [vmem:[#allocation12 + $0x40] sm:$0xff]
    %v1457 = vld [vmem:[#allocation12 + $0x48] sm:$0xff]
    %v1458 = vld [vmem:[#allocation12 + $0x50] sm:$0xff]
    %v1459 = vld [vmem:[#allocation12 + $0x58] sm:$0xff]
    %v1460 = vld [vmem:[#allocation12 + $0x60] sm:$0xff]
    %v1461 = vld [vmem:[#allocation12 + $0x68] sm:$0xff]
    %v1462 = vld [vmem:[#allocation12 + $0x70] sm:$0xff]
    %v1463 = vld [vmem:[#allocation12 + $0x78] sm:$0xff]
    %v1464 = vld [vmem:[#allocation12 + $0x80] sm:$0xff]
    %v1465 = vld [vmem:[#allocation12 + $0x88] sm:$0xff]
    %v1466 = vld [vmem:[#allocation12 + $0x90] sm:$0xff]
    %v1467 = vld [vmem:[#allocation12 + $0x98] sm:$0xff]
    %v1468 = vld [vmem:[#allocation12 + $0xa0] sm:$0xff]
    %v1469 = vld [vmem:[#allocation12 + $0xa8] sm:$0xff]
    %v1470 = vld [vmem:[#allocation12 + $0xb0] sm:$0xff]
    %v1471 = vld [vmem:[#allocation12 + $0xb8] sm:$0xff]
    %v1472 = vld [vmem:[#allocation12 + $0xc0] sm:$0xff]
    %v1473 = vld [vmem:[#allocation12 + $0xc8] sm:$0xff]
    %v1474 = vld [vmem:[#allocation12 + $0xd0] sm:$0xff]
    %v1475 = vld [vmem:[#allocation12 + $0xd8] sm:$0xff]
    %v1476 = vld [vmem:[#allocation12 + $0xe0] sm:$0xff]
    %v1477 = vld [vmem:[#allocation12 + $0xe8] sm:$0xff]
    %v1478 = vld [vmem:[#allocation12 + $0xf0] sm:$0xff]
    %v1479 = vld [vmem:[#allocation12 + $0xf8] sm:$0xff]
    %v1480 = vld [vmem:[#allocation12 + $0x100] sm:$0xff]
    %v1481 = vld [vmem:[#allocation12 + $0x108] sm:$0xff]
    %v1482 = vld [vmem:[#allocation12 + $0x110] sm:$0xff]
    %v1483 = vld [vmem:[#allocation12 + $0x118] sm:$0xff]
    %v1484 = vld [vmem:[#allocation12 + $0x120] sm:$0xff]
    %v1485 = vld [vmem:[#allocation12 + $0x128] sm:$0xff]
    %v1486 = vld [vmem:[#allocation12 + $0x130] sm:$0xff]
    %v1487 = vld [vmem:[#allocation12 + $0x138] sm:$0xff]
    %v1488 = vld [vmem:[#allocation12 + $0x140] sm:$0xff]
    %v1489 = vld [vmem:[#allocation12 + $0x148] sm:$0xff]
    %v1490 = vld [vmem:[#allocation12 + $0x150] sm:$0xff]
    %v1491 = vld [vmem:[#allocation12 + $0x158] sm:$0xff]
    %v1492 = vld [vmem:[#allocation12 + $0x160] sm:$0xff]
    %v1493 = vld [vmem:[#allocation12 + $0x168] sm:$0xff]
    %v1494 = vld [vmem:[#allocation12 + $0x170] sm:$0xff]
    %v1495 = vld [vmem:[#allocation12 + $0x178] sm:$0xff]
    %v1496 = vld [vmem:[#allocation12 + $0x180] sm:$0xff]
    %v1497 = vld [vmem:[#allocation12 + $0x188] sm:$0xff]
    %v1498 = vld [vmem:[#allocation12 + $0x190] sm:$0xff]
    %v1499 = vld [vmem:[#allocation12 + $0x198] sm:$0xff]
    %v1500 = vld [vmem:[#allocation12 + $0x1a0] sm:$0xff]
    %v1501 = vld [vmem:[#allocation12 + $0x1a8] sm:$0xff]
    %v1502 = vld [vmem:[#allocation12 + $0x1b0] sm:$0xff]
    %v1503 = vld [vmem:[#allocation12 + $0x1b8] sm:$0xff]
    %v1504 = vld [vmem:[#allocation12 + $0x1c0] sm:$0xff]
    %v1505 = vld [vmem:[#allocation12 + $0x1c8] sm:$0xff]
    %v1506 = vld [vmem:[#allocation12 + $0x1d0] sm:$0xff]
    %v1507 = vld [vmem:[#allocation12 + $0x1d8] sm:$0xff]
    %v1508 = vld [vmem:[#allocation12 + $0x1e0] sm:$0xff]
    %v1509 = vld [vmem:[#allocation12 + $0x1e8] sm:$0xff]
    %v1510 = vld [vmem:[#allocation12 + $0x1f0] sm:$0xff]
    %v1511 = vld [vmem:[#allocation12 + $0x1f8] sm:$0xff]
    %v1512 = vld [vmem:[#allocation12 + $0x200] sm:$0xff]
    %v1513 = vld [vmem:[#allocation12 + $0x208] sm:$0xff]
    %v1514 = vld [vmem:[#allocation12 + $0x210] sm:$0xff]
    %v1515 = vld [vmem:[#allocation12 + $0x218] sm:$0xff]
    %v1516 = vld [vmem:[#allocation12 + $0x220] sm:$0xff]
    %v1517 = vld [vmem:[#allocation12 + $0x228] sm:$0xff]
    %v1518 = vld [vmem:[#allocation12 + $0x230] sm:$0xff]
    %v1519 = vld [vmem:[#allocation12 + $0x238] sm:$0xff]
    %v1520 = vld [vmem:[#allocation12 + $0x240] sm:$0xff]
    %v1521 = vld [vmem:[#allocation12 + $0x248] sm:$0xff]
    %v1522 = vld [vmem:[#allocation12 + $0x250] sm:$0xff]
    %v1523 = vld [vmem:[#allocation12 + $0x258] sm:$0xff]
    %v1524 = vld [vmem:[#allocation12 + $0x260] sm:$0xff]
    %v1525 = vld [vmem:[#allocation12 + $0x268] sm:$0xff]
    %v1526 = vld [vmem:[#allocation12 + $0x270] sm:$0xff]
    %v1527 = vld [vmem:[#allocation12 + $0x278] sm:$0xff]
    %v1528 = vld [vmem:[#allocation12 + $0x280] sm:$0xff]
    %v1529 = vld [vmem:[#allocation12 + $0x288] sm:$0xff]
    %v1530 = vld [vmem:[#allocation12 + $0x290] sm:$0xff]
    %v1531 = vld [vmem:[#allocation12 + $0x298] sm:$0xff]
    %v1532 = vld [vmem:[#allocation12 + $0x2a0] sm:$0xff]
    %v1533 = vld [vmem:[#allocation12 + $0x2a8] sm:$0xff]
    %v1534 = vld [vmem:[#allocation12 + $0x2b0] sm:$0xff]
    %v1535 = vld [vmem:[#allocation12 + $0x2b8] sm:$0xff]
    %v1536 = vld [vmem:[#allocation12 + $0x2c0] sm:$0xff]
    %v1537 = vld [vmem:[#allocation12 + $0x2c8] sm:$0xff]
    %v1538 = vld [vmem:[#allocation12 + $0x2d0] sm:$0xff]
    %v1539 = vld [vmem:[#allocation12 + $0x2d8] sm:$0xff]
    %v1540 = vld [vmem:[#allocation12 + $0x2e0] sm:$0xff]
    %v1541 = vld [vmem:[#allocation12 + $0x2e8] sm:$0xff]
    %v1542 = vld [vmem:[#allocation12 + $0x2f0] sm:$0xff]
    %v1543 = vld [vmem:[#allocation12 + $0x2f8] sm:$0xff]
    %v1544 = vld [vmem:[#allocation12 + $0x300] sm:$0xff]
    %v1545 = vld [vmem:[#allocation12 + $0x308] sm:$0xff]
    %v1546 = vld [vmem:[#allocation12 + $0x310] sm:$0xff]
    %v1547 = vld [vmem:[#allocation12 + $0x318] sm:$0xff]
    %v1548 = vld [vmem:[#allocation12 + $0x320] sm:$0xff]
    %v1549 = vld [vmem:[#allocation12 + $0x328] sm:$0xff]
    %v1550 = vld [vmem:[#allocation12 + $0x330] sm:$0xff]
    %v1551 = vld [vmem:[#allocation12 + $0x338] sm:$0xff]
    %v1552 = vld [vmem:[#allocation12 + $0x340] sm:$0xff]
    %v1553 = vld [vmem:[#allocation12 + $0x348] sm:$0xff]
    %v1554 = vld [vmem:[#allocation12 + $0x350] sm:$0xff]
    %v1555 = vld [vmem:[#allocation12 + $0x358] sm:$0xff]
    %v1556 = vld [vmem:[#allocation12 + $0x360] sm:$0xff]
    %v1557 = vld [vmem:[#allocation12 + $0x368] sm:$0xff]
    %v1558 = vld [vmem:[#allocation12 + $0x370] sm:$0xff]
    %v1559 = vld [vmem:[#allocation12 + $0x378] sm:$0xff]
    %v1560 = vld [vmem:[#allocation12 + $0x380] sm:$0xff]
    %v1561 = vld [vmem:[#allocation12 + $0x388] sm:$0xff]
    %v1562 = vld [vmem:[#allocation12 + $0x390] sm:$0xff]
    %v1563 = vld [vmem:[#allocation12 + $0x398] sm:$0xff]
    %v1564 = vld [vmem:[#allocation12 + $0x3a0] sm:$0xff]
    %v1565 = vld [vmem:[#allocation12 + $0x3a8] sm:$0xff]
    %v1566 = vld [vmem:[#allocation12 + $0x3b0] sm:$0xff]
    %v1567 = vld [vmem:[#allocation12 + $0x3b8] sm:$0xff]
    %v1568 = vld [vmem:[#allocation12 + $0x3c0] sm:$0xff]
    %v1569 = vld [vmem:[#allocation12 + $0x3c8] sm:$0xff]
    %v1570 = vld [vmem:[#allocation12 + $0x3d0] sm:$0xff]
    %v1571 = vld [vmem:[#allocation12 + $0x3d8] sm:$0xff]
    %v1572 = vld [vmem:[#allocation12 + $0x3e0] sm:$0xff]
    %v1573 = vld [vmem:[#allocation12 + $0x3e8] sm:$0xff]
    %v1574 = vld [vmem:[#allocation12 + $0x3f0] sm:$0xff]
    %v1575 = vld [vmem:[#allocation12 + $0x3f8] sm:$0xff]
    %v1576 = vld [vmem:[#allocation14] sm:$0xf]
    %v1578 = vlaneseq
    %v1579 = vshrl.u32 %v1578, 7
    %v1580 = vsub.s32 0, %v1579
    %v1581 = vrot.slane %v1576, %v1580
    %v1582 = vlaneseq
    %v1583 = vshrl.u32 %v1582, 7
    %v1584 = vsub.s32 1, %v1583
    %v1585 = vrot.slane %v1576, %v1584
    %v1586 = vlaneseq
    %v1587 = vshrl.u32 %v1586, 7
    %v1588 = vsub.s32 2, %v1587
    %v1589 = vrot.slane %v1576, %v1588
    %v1590 = vlaneseq
    %v1591 = vshrl.u32 %v1590, 7
    %v1592 = vsub.s32 3, %v1591
    %v1593 = vrot.slane %v1576, %v1592
    %v1726 = vunpack.c.l.b16 %v1448
    %v1727 = vunpack.c.h.b16 %v1448
    %v1728 = vunpack.c.l.b16 %v1449
    %v1729 = vunpack.c.h.b16 %v1449
    %v1730 = vunpack.c.l.b16 %v1450
    %v1731 = vunpack.c.h.b16 %v1450
    %v1732 = vunpack.c.l.b16 %v1451
    %v1733 = vunpack.c.h.b16 %v1451
    %v1734 = vunpack.c.l.b16 %v1452
    %v1735 = vunpack.c.h.b16 %v1452
    %v1736 = vunpack.c.l.b16 %v1453
    %v1737 = vunpack.c.h.b16 %v1453
    %v1738 = vunpack.c.l.b16 %v1454
    %v1739 = vunpack.c.h.b16 %v1454
    %v1740 = vunpack.c.l.b16 %v1455
    %v1741 = vunpack.c.h.b16 %v1455
    %v1742 = vunpack.c.l.b16 %v1456
    %v1743 = vunpack.c.h.b16 %v1456
    %v1744 = vunpack.c.l.b16 %v1457
    %v1745 = vunpack.c.h.b16 %v1457
    %v1746 = vunpack.c.l.b16 %v1458
    %v1747 = vunpack.c.h.b16 %v1458
    %v1748 = vunpack.c.l.b16 %v1459
    %v1749 = vunpack.c.h.b16 %v1459
    %v1750 = vunpack.c.l.b16 %v1460
    %v1751 = vunpack.c.h.b16 %v1460
    %v1752 = vunpack.c.l.b16 %v1461
    %v1753 = vunpack.c.h.b16 %v1461
    %v1754 = vunpack.c.l.b16 %v1462
    %v1755 = vunpack.c.h.b16 %v1462
    %v1756 = vunpack.c.l.b16 %v1463
    %v1757 = vunpack.c.h.b16 %v1463
    %v1758 = vunpack.c.l.b16 %v1464
    %v1759 = vunpack.c.h.b16 %v1464
    %v1760 = vunpack.c.l.b16 %v1465
    %v1761 = vunpack.c.h.b16 %v1465
    %v1762 = vunpack.c.l.b16 %v1466
    %v1763 = vunpack.c.h.b16 %v1466
    %v1764 = vunpack.c.l.b16 %v1467
    %v1765 = vunpack.c.h.b16 %v1467
    %v1766 = vunpack.c.l.b16 %v1468
    %v1767 = vunpack.c.h.b16 %v1468
    %v1768 = vunpack.c.l.b16 %v1469
    %v1769 = vunpack.c.h.b16 %v1469
    %v1770 = vunpack.c.l.b16 %v1470
    %v1771 = vunpack.c.h.b16 %v1470
    %v1772 = vunpack.c.l.b16 %v1471
    %v1773 = vunpack.c.h.b16 %v1471
    %v1774 = vunpack.c.l.b16 %v1472
    %v1775 = vunpack.c.h.b16 %v1472
    %v1776 = vunpack.c.l.b16 %v1473
    %v1777 = vunpack.c.h.b16 %v1473
    %v1778 = vunpack.c.l.b16 %v1474
    %v1779 = vunpack.c.h.b16 %v1474
    %v1780 = vunpack.c.l.b16 %v1475
    %v1781 = vunpack.c.h.b16 %v1475
    %v1782 = vunpack.c.l.b16 %v1476
    %v1783 = vunpack.c.h.b16 %v1476
    %v1784 = vunpack.c.l.b16 %v1477
    %v1785 = vunpack.c.h.b16 %v1477
    %v1786 = vunpack.c.l.b16 %v1478
    %v1787 = vunpack.c.h.b16 %v1478
    %v1788 = vunpack.c.l.b16 %v1479
    %v1789 = vunpack.c.h.b16 %v1479
    %v1790 = vunpack.c.l.b16 %v1480
    %v1791 = vunpack.c.h.b16 %v1480
    %v1792 = vunpack.c.l.b16 %v1481
    %v1793 = vunpack.c.h.b16 %v1481
    %v1794 = vunpack.c.l.b16 %v1482
    %v1795 = vunpack.c.h.b16 %v1482
    %v1796 = vunpack.c.l.b16 %v1483
    %v1797 = vunpack.c.h.b16 %v1483
    %v1798 = vunpack.c.l.b16 %v1484
    %v1799 = vunpack.c.h.b16 %v1484
    %v1800 = vunpack.c.l.b16 %v1485
    %v1801 = vunpack.c.h.b16 %v1485
    %v1802 = vunpack.c.l.b16 %v1486
    %v1803 = vunpack.c.h.b16 %v1486
    %v1804 = vunpack.c.l.b16 %v1487
    %v1805 = vunpack.c.h.b16 %v1487
    %v1806 = vunpack.c.l.b16 %v1488
    %v1807 = vunpack.c.h.b16 %v1488
    %v1808 = vunpack.c.l.b16 %v1489
    %v1809 = vunpack.c.h.b16 %v1489
    %v1810 = vunpack.c.l.b16 %v1490
    %v1811 = vunpack.c.h.b16 %v1490
    %v1812 = vunpack.c.l.b16 %v1491
    %v1813 = vunpack.c.h.b16 %v1491
    %v1814 = vunpack.c.l.b16 %v1492
    %v1815 = vunpack.c.h.b16 %v1492
    %v1816 = vunpack.c.l.b16 %v1493
    %v1817 = vunpack.c.h.b16 %v1493
    %v1818 = vunpack.c.l.b16 %v1494
    %v1819 = vunpack.c.h.b16 %v1494
    %v1820 = vunpack.c.l.b16 %v1495
    %v1821 = vunpack.c.h.b16 %v1495
    %v1822 = vunpack.c.l.b16 %v1496
    %v1823 = vunpack.c.h.b16 %v1496
    %v1824 = vunpack.c.l.b16 %v1497
    %v1825 = vunpack.c.h.b16 %v1497
    %v1826 = vunpack.c.l.b16 %v1498
    %v1827 = vunpack.c.h.b16 %v1498
    %v1828 = vunpack.c.l.b16 %v1499
    %v1829 = vunpack.c.h.b16 %v1499
    %v1830 = vunpack.c.l.b16 %v1500
    %v1831 = vunpack.c.h.b16 %v1500
    %v1832 = vunpack.c.l.b16 %v1501
    %v1833 = vunpack.c.h.b16 %v1501
    %v1834 = vunpack.c.l.b16 %v1502
    %v1835 = vunpack.c.h.b16 %v1502
    %v1836 = vunpack.c.l.b16 %v1503
    %v1837 = vunpack.c.h.b16 %v1503
    %v1838 = vunpack.c.l.b16 %v1504
    %v1839 = vunpack.c.h.b16 %v1504
    %v1840 = vunpack.c.l.b16 %v1505
    %v1841 = vunpack.c.h.b16 %v1505
    %v1842 = vunpack.c.l.b16 %v1506
    %v1843 = vunpack.c.h.b16 %v1506
    %v1844 = vunpack.c.l.b16 %v1507
    %v1845 = vunpack.c.h.b16 %v1507
    %v1846 = vunpack.c.l.b16 %v1508
    %v1847 = vunpack.c.h.b16 %v1508
    %v1848 = vunpack.c.l.b16 %v1509
    %v1849 = vunpack.c.h.b16 %v1509
    %v1850 = vunpack.c.l.b16 %v1510
    %v1851 = vunpack.c.h.b16 %v1510
    %v1852 = vunpack.c.l.b16 %v1511
    %v1853 = vunpack.c.h.b16 %v1511
    %v1854 = vunpack.c.l.b16 %v1512
    %v1855 = vunpack.c.h.b16 %v1512
    %v1856 = vunpack.c.l.b16 %v1513
    %v1857 = vunpack.c.h.b16 %v1513
    %v1858 = vunpack.c.l.b16 %v1514
    %v1859 = vunpack.c.h.b16 %v1514
    %v1860 = vunpack.c.l.b16 %v1515
    %v1861 = vunpack.c.h.b16 %v1515
    %v1862 = vunpack.c.l.b16 %v1516
    %v1863 = vunpack.c.h.b16 %v1516
    %v1864 = vunpack.c.l.b16 %v1517
    %v1865 = vunpack.c.h.b16 %v1517
    %v1866 = vunpack.c.l.b16 %v1518
    %v1867 = vunpack.c.h.b16 %v1518
    %v1868 = vunpack.c.l.b16 %v1519
    %v1869 = vunpack.c.h.b16 %v1519
    %v1870 = vunpack.c.l.b16 %v1520
    %v1871 = vunpack.c.h.b16 %v1520
    %v1872 = vunpack.c.l.b16 %v1521
    %v1873 = vunpack.c.h.b16 %v1521
    %v1874 = vunpack.c.l.b16 %v1522
    %v1875 = vunpack.c.h.b16 %v1522
    %v1876 = vunpack.c.l.b16 %v1523
    %v1877 = vunpack.c.h.b16 %v1523
    %v1878 = vunpack.c.l.b16 %v1524
    %v1879 = vunpack.c.h.b16 %v1524
    %v1880 = vunpack.c.l.b16 %v1525
    %v1881 = vunpack.c.h.b16 %v1525
    %v1882 = vunpack.c.l.b16 %v1526
    %v1883 = vunpack.c.h.b16 %v1526
    %v1884 = vunpack.c.l.b16 %v1527
    %v1885 = vunpack.c.h.b16 %v1527
    %v1886 = vunpack.c.l.b16 %v1528
    %v1887 = vunpack.c.h.b16 %v1528
    %v1888 = vunpack.c.l.b16 %v1529
    %v1889 = vunpack.c.h.b16 %v1529
    %v1890 = vunpack.c.l.b16 %v1530
    %v1891 = vunpack.c.h.b16 %v1530
    %v1892 = vunpack.c.l.b16 %v1531
    %v1893 = vunpack.c.h.b16 %v1531
    %v1894 = vunpack.c.l.b16 %v1532
    %v1895 = vunpack.c.h.b16 %v1532
    %v1896 = vunpack.c.l.b16 %v1533
    %v1897 = vunpack.c.h.b16 %v1533
    %v1898 = vunpack.c.l.b16 %v1534
    %v1899 = vunpack.c.h.b16 %v1534
    %v1900 = vunpack.c.l.b16 %v1535
    %v1901 = vunpack.c.h.b16 %v1535
    %v1902 = vunpack.c.l.b16 %v1536
    %v1903 = vunpack.c.h.b16 %v1536
    %v1904 = vunpack.c.l.b16 %v1537
    %v1905 = vunpack.c.h.b16 %v1537
    %v1906 = vunpack.c.l.b16 %v1538
    %v1907 = vunpack.c.h.b16 %v1538
    %v1908 = vunpack.c.l.b16 %v1539
    %v1909 = vunpack.c.h.b16 %v1539
    %v1910 = vunpack.c.l.b16 %v1540
    %v1911 = vunpack.c.h.b16 %v1540
    %v1912 = vunpack.c.l.b16 %v1541
    %v1913 = vunpack.c.h.b16 %v1541
    %v1914 = vunpack.c.l.b16 %v1542
    %v1915 = vunpack.c.h.b16 %v1542
    %v1916 = vunpack.c.l.b16 %v1543
    %v1917 = vunpack.c.h.b16 %v1543
    %v1918 = vunpack.c.l.b16 %v1544
    %v1919 = vunpack.c.h.b16 %v1544
    %v1920 = vunpack.c.l.b16 %v1545
    %v1921 = vunpack.c.h.b16 %v1545
    %v1922 = vunpack.c.l.b16 %v1546
    %v1923 = vunpack.c.h.b16 %v1546
    %v1924 = vunpack.c.l.b16 %v1547
    %v1925 = vunpack.c.h.b16 %v1547
    %v1926 = vunpack.c.l.b16 %v1548
    %v1927 = vunpack.c.h.b16 %v1548
    %v1928 = vunpack.c.l.b16 %v1549
    %v1929 = vunpack.c.h.b16 %v1549
    %v1930 = vunpack.c.l.b16 %v1550
    %v1931 = vunpack.c.h.b16 %v1550
    %v1932 = vunpack.c.l.b16 %v1551
    %v1933 = vunpack.c.h.b16 %v1551
    %v1934 = vunpack.c.l.b16 %v1552
    %v1935 = vunpack.c.h.b16 %v1552
    %v1936 = vunpack.c.l.b16 %v1553
    %v1937 = vunpack.c.h.b16 %v1553
    %v1938 = vunpack.c.l.b16 %v1554
    %v1939 = vunpack.c.h.b16 %v1554
    %v1940 = vunpack.c.l.b16 %v1555
    %v1941 = vunpack.c.h.b16 %v1555
    %v1942 = vunpack.c.l.b16 %v1556
    %v1943 = vunpack.c.h.b16 %v1556
    %v1944 = vunpack.c.l.b16 %v1557
    %v1945 = vunpack.c.h.b16 %v1557
    %v1946 = vunpack.c.l.b16 %v1558
    %v1947 = vunpack.c.h.b16 %v1558
    %v1948 = vunpack.c.l.b16 %v1559
    %v1949 = vunpack.c.h.b16 %v1559
    %v1950 = vunpack.c.l.b16 %v1560
    %v1951 = vunpack.c.h.b16 %v1560
    %v1952 = vunpack.c.l.b16 %v1561
    %v1953 = vunpack.c.h.b16 %v1561
    %v1954 = vunpack.c.l.b16 %v1562
    %v1955 = vunpack.c.h.b16 %v1562
    %v1956 = vunpack.c.l.b16 %v1563
    %v1957 = vunpack.c.h.b16 %v1563
    %v1958 = vunpack.c.l.b16 %v1564
    %v1959 = vunpack.c.h.b16 %v1564
    %v1960 = vunpack.c.l.b16 %v1565
    %v1961 = vunpack.c.h.b16 %v1565
    %v1962 = vunpack.c.l.b16 %v1566
    %v1963 = vunpack.c.h.b16 %v1566
    %v1964 = vunpack.c.l.b16 %v1567
    %v1965 = vunpack.c.h.b16 %v1567
    %v1966 = vunpack.c.l.b16 %v1568
    %v1967 = vunpack.c.h.b16 %v1568
    %v1968 = vunpack.c.l.b16 %v1569
    %v1969 = vunpack.c.h.b16 %v1569
    %v1970 = vunpack.c.l.b16 %v1570
    %v1971 = vunpack.c.h.b16 %v1570
    %v1972 = vunpack.c.l.b16 %v1571
    %v1973 = vunpack.c.h.b16 %v1571
    %v1974 = vunpack.c.l.b16 %v1572
    %v1975 = vunpack.c.h.b16 %v1572
    %v1976 = vunpack.c.l.b16 %v1573
    %v1977 = vunpack.c.h.b16 %v1573
    %v1978 = vunpack.c.l.b16 %v1574
    %v1979 = vunpack.c.h.b16 %v1574
    %v1980 = vunpack.c.l.b16 %v1575
    %v1981 = vunpack.c.h.b16 %v1575
    %v1982 = vpack.c.b16 %v1730, %v1726
    %v1983 = vpack.c.b16 %v1731, %v1727
    %v1984 = vpack.c.b16 %v1732, %v1728
    %v1985 = vpack.c.b16 %v1733, %v1729
    %v1986 = vpack.c.b16 %v1738, %v1734
    %v1987 = vpack.c.b16 %v1739, %v1735
    %v1988 = vpack.c.b16 %v1740, %v1736
    %v1989 = vpack.c.b16 %v1741, %v1737
    %v1990 = vpack.c.b16 %v1746, %v1742
    %v1991 = vpack.c.b16 %v1747, %v1743
    %v1992 = vpack.c.b16 %v1748, %v1744
    %v1993 = vpack.c.b16 %v1749, %v1745
    %v1994 = vpack.c.b16 %v1754, %v1750
    %v1995 = vpack.c.b16 %v1755, %v1751
    %v1996 = vpack.c.b16 %v1756, %v1752
    %v1997 = vpack.c.b16 %v1757, %v1753
    %v1998 = vpack.c.b16 %v1762, %v1758
    %v1999 = vpack.c.b16 %v1763, %v1759
    %v2000 = vpack.c.b16 %v1764, %v1760
    %v2001 = vpack.c.b16 %v1765, %v1761
    %v2002 = vpack.c.b16 %v1770, %v1766
    %v2003 = vpack.c.b16 %v1771, %v1767
    %v2004 = vpack.c.b16 %v1772, %v1768
    %v2005 = vpack.c.b16 %v1773, %v1769
    %v2006 = vpack.c.b16 %v1778, %v1774
    %v2007 = vpack.c.b16 %v1779, %v1775
    %v2008 = vpack.c.b16 %v1780, %v1776
    %v2009 = vpack.c.b16 %v1781, %v1777
    %v2010 = vpack.c.b16 %v1786, %v1782
    %v2011 = vpack.c.b16 %v1787, %v1783
    %v2012 = vpack.c.b16 %v1788, %v1784
    %v2013 = vpack.c.b16 %v1789, %v1785
    %v2014 = vpack.c.b16 %v1794, %v1790
    %v2015 = vpack.c.b16 %v1795, %v1791
    %v2016 = vpack.c.b16 %v1796, %v1792
    %v2017 = vpack.c.b16 %v1797, %v1793
    %v2018 = vpack.c.b16 %v1802, %v1798
    %v2019 = vpack.c.b16 %v1803, %v1799
    %v2020 = vpack.c.b16 %v1804, %v1800
    %v2021 = vpack.c.b16 %v1805, %v1801
    %v2022 = vpack.c.b16 %v1810, %v1806
    %v2023 = vpack.c.b16 %v1811, %v1807
    %v2024 = vpack.c.b16 %v1812, %v1808
    %v2025 = vpack.c.b16 %v1813, %v1809
    %v2026 = vpack.c.b16 %v1818, %v1814
    %v2027 = vpack.c.b16 %v1819, %v1815
    %v2028 = vpack.c.b16 %v1820, %v1816
    %v2029 = vpack.c.b16 %v1821, %v1817
    %v2030 = vpack.c.b16 %v1826, %v1822
    %v2031 = vpack.c.b16 %v1827, %v1823
    %v2032 = vpack.c.b16 %v1828, %v1824
    %v2033 = vpack.c.b16 %v1829, %v1825
    %v2034 = vpack.c.b16 %v1834, %v1830
    %v2035 = vpack.c.b16 %v1835, %v1831
    %v2036 = vpack.c.b16 %v1836, %v1832
    %v2037 = vpack.c.b16 %v1837, %v1833
    %v2038 = vpack.c.b16 %v1842, %v1838
    %v2039 = vpack.c.b16 %v1843, %v1839
    %v2040 = vpack.c.b16 %v1844, %v1840
    %v2041 = vpack.c.b16 %v1845, %v1841
    %v2042 = vpack.c.b16 %v1850, %v1846
    %v2043 = vpack.c.b16 %v1851, %v1847
    %v2044 = vpack.c.b16 %v1852, %v1848
    %v2045 = vpack.c.b16 %v1853, %v1849
    %v2046 = vpack.c.b16 %v1858, %v1854
    %v2047 = vpack.c.b16 %v1859, %v1855
    %v2048 = vpack.c.b16 %v1860, %v1856
    %v2049 = vpack.c.b16 %v1861, %v1857
    %v2050 = vpack.c.b16 %v1866, %v1862
    %v2051 = vpack.c.b16 %v1867, %v1863
    %v2052 = vpack.c.b16 %v1868, %v1864
    %v2053 = vpack.c.b16 %v1869, %v1865
    %v2054 = vpack.c.b16 %v1874, %v1870
    %v2055 = vpack.c.b16 %v1875, %v1871
    %v2056 = vpack.c.b16 %v1876, %v1872
    %v2057 = vpack.c.b16 %v1877, %v1873
    %v2058 = vpack.c.b16 %v1882, %v1878
    %v2059 = vpack.c.b16 %v1883, %v1879
    %v2060 = vpack.c.b16 %v1884, %v1880
    %v2061 = vpack.c.b16 %v1885, %v1881
    %v2062 = vpack.c.b16 %v1890, %v1886
    %v2063 = vpack.c.b16 %v1891, %v1887
    %v2064 = vpack.c.b16 %v1892, %v1888
    %v2065 = vpack.c.b16 %v1893, %v1889
    %v2066 = vpack.c.b16 %v1898, %v1894
    %v2067 = vpack.c.b16 %v1899, %v1895
    %v2068 = vpack.c.b16 %v1900, %v1896
    %v2069 = vpack.c.b16 %v1901, %v1897
    %v2070 = vpack.c.b16 %v1906, %v1902
    %v2071 = vpack.c.b16 %v1907, %v1903
    %v2072 = vpack.c.b16 %v1908, %v1904
    %v2073 = vpack.c.b16 %v1909, %v1905
    %v2074 = vpack.c.b16 %v1914, %v1910
    %v2075 = vpack.c.b16 %v1915, %v1911
    %v2076 = vpack.c.b16 %v1916, %v1912
    %v2077 = vpack.c.b16 %v1917, %v1913
    %v2078 = vpack.c.b16 %v1922, %v1918
    %v2079 = vpack.c.b16 %v1923, %v1919
    %v2080 = vpack.c.b16 %v1924, %v1920
    %v2081 = vpack.c.b16 %v1925, %v1921
    %v2082 = vpack.c.b16 %v1930, %v1926
    %v2083 = vpack.c.b16 %v1931, %v1927
    %v2084 = vpack.c.b16 %v1932, %v1928
    %v2085 = vpack.c.b16 %v1933, %v1929
    %v2086 = vpack.c.b16 %v1938, %v1934
    %v2087 = vpack.c.b16 %v1939, %v1935
    %v2088 = vpack.c.b16 %v1940, %v1936
    %v2089 = vpack.c.b16 %v1941, %v1937
    %v2090 = vpack.c.b16 %v1946, %v1942
    %v2091 = vpack.c.b16 %v1947, %v1943
    %v2092 = vpack.c.b16 %v1948, %v1944
    %v2093 = vpack.c.b16 %v1949, %v1945
    %v2094 = vpack.c.b16 %v1954, %v1950
    %v2095 = vpack.c.b16 %v1955, %v1951
    %v2096 = vpack.c.b16 %v1956, %v1952
    %v2097 = vpack.c.b16 %v1957, %v1953
    %v2098 = vpack.c.b16 %v1962, %v1958
    %v2099 = vpack.c.b16 %v1963, %v1959
    %v2100 = vpack.c.b16 %v1964, %v1960
    %v2101 = vpack.c.b16 %v1965, %v1961
    %v2102 = vpack.c.b16 %v1970, %v1966
    %v2103 = vpack.c.b16 %v1971, %v1967
    %v2104 = vpack.c.b16 %v1972, %v1968
    %v2105 = vpack.c.b16 %v1973, %v1969
    %v2106 = vpack.c.b16 %v1978, %v1974
    %v2107 = vpack.c.b16 %v1979, %v1975
    %v2108 = vpack.c.b16 %v1980, %v1976
    %v2109 = vpack.c.b16 %v1981, %v1977
    %2238 = vmatprep.subr.bf16.mxu0 %v1983
    %2239 = vmatpush1.bf16.msra.mxu0 %v1982
    %2240 = vmatprep.subr.bf16.mxu0 %v1987
    %2241 = vmatpush1.bf16.msra.mxu0 %v1986
    %2242 = vmatprep.subr.bf16.mxu0 %v1991
    %2243 = vmatpush1.bf16.msra.mxu0 %v1990
    %2244 = vmatprep.subr.bf16.mxu0 %v1995
    %2245 = vmatpush1.bf16.msra.mxu0 %v1994
    %2246 = vmatprep.subr.bf16.mxu0 %v1999
    %2247 = vmatpush1.bf16.msra.mxu0 %v1998
    %2248 = vmatprep.subr.bf16.mxu0 %v2003
    %2249 = vmatpush1.bf16.msra.mxu0 %v2002
    %2250 = vmatprep.subr.bf16.mxu0 %v2007
    %2251 = vmatpush1.bf16.msra.mxu0 %v2006
    %2252 = vmatprep.subr.bf16.mxu0 %v2011
    %2253 = vmatpush1.bf16.msra.mxu0 %v2010
    %2254 = vmatprep.subr.bf16.mxu0 %v2015
    %2255 = vmatpush1.bf16.msra.mxu0 %v2014
    %2256 = vmatprep.subr.bf16.mxu0 %v2019
    %2257 = vmatpush1.bf16.msra.mxu0 %v2018
    %2258 = vmatprep.subr.bf16.mxu0 %v2023
    %2259 = vmatpush1.bf16.msra.mxu0 %v2022
    %2260 = vmatprep.subr.bf16.mxu0 %v2027
    %2261 = vmatpush1.bf16.msra.mxu0 %v2026
    %2262 = vmatprep.subr.bf16.mxu0 %v2031
    %2263 = vmatpush1.bf16.msra.mxu0 %v2030
    %2264 = vmatprep.subr.bf16.mxu0 %v2035
    %2265 = vmatpush1.bf16.msra.mxu0 %v2034
    %2266 = vmatprep.subr.bf16.mxu0 %v2039
    %2267 = vmatpush1.bf16.msra.mxu0 %v2038
    %2268 = vmatprep.subr.bf16.mxu0 %v2043
    %2269 = vmatpush1.bf16.msra.mxu0 %v2042
    %2270 = vmatprep.mubr.bf16.mxu0 %v487
    %2271 = vmatmul.mubr.bf16.gmra.mrb[0].mxu0 %v486
    %v2272 = vpop.f32.mrb[0].mxu0
    %v2273 = vadd.f32 %v1581, %v2272
    %v2274 = vpop.f32.mrb[0].mxu0
    %v2275 = vadd.f32 %v1585, %v2274
    %v2276 = vpop.f32.mrb[0].mxu0
    %v2277 = vpop.f32.mrb[0].mxu0
    %2278 = vdwg.mxu0
    %2279 = vmatprep.subr.bf16.mxu0 %v2047
    %2280 = vmatpush1.bf16.msra.mxu0 %v2046
    %2281 = vmatprep.subr.bf16.mxu0 %v2051
    %2282 = vmatpush1.bf16.msra.mxu0 %v2050
    %2283 = vmatprep.subr.bf16.mxu0 %v2055
    %2284 = vmatpush1.bf16.msra.mxu0 %v2054
    %2285 = vmatprep.subr.bf16.mxu0 %v2059
    %2286 = vmatpush1.bf16.msra.mxu0 %v2058
    %2287 = vmatprep.subr.bf16.mxu0 %v2063
    %2288 = vmatpush1.bf16.msra.mxu0 %v2062
    %2289 = vmatprep.subr.bf16.mxu0 %v2067
    %2290 = vmatpush1.bf16.msra.mxu0 %v2066
    %2291 = vmatprep.subr.bf16.mxu0 %v2071
    %2292 = vmatpush1.bf16.msra.mxu0 %v2070
    %2293 = vmatprep.subr.bf16.mxu0 %v2075
    %2294 = vmatpush1.bf16.msra.mxu0 %v2074
    %2295 = vmatprep.subr.bf16.mxu0 %v2079
    %2296 = vmatpush1.bf16.msra.mxu0 %v2078
    %2297 = vmatprep.subr.bf16.mxu0 %v2083
    %2298 = vmatpush1.bf16.msra.mxu0 %v2082
    %2299 = vmatprep.subr.bf16.mxu0 %v2087
    %2300 = vmatpush1.bf16.msra.mxu0 %v2086
    %2301 = vmatprep.subr.bf16.mxu0 %v2091
    %2302 = vmatpush1.bf16.msra.mxu0 %v2090
    %2303 = vmatprep.subr.bf16.mxu0 %v2095
    %2304 = vmatpush1.bf16.msra.mxu0 %v2094
    %2305 = vmatprep.subr.bf16.mxu0 %v2099
    %2306 = vmatpush1.bf16.msra.mxu0 %v2098
    %2307 = vmatprep.subr.bf16.mxu0 %v2103
    %2308 = vmatpush1.bf16.msra.mxu0 %v2102
    %2309 = vmatprep.subr.bf16.mxu0 %v2107
    %2310 = vmatpush1.bf16.msra.mxu0 %v2106
    %2311 = vmatprep.mubr.bf16.mxu0 %v489
    %2312 = vmatmul.mubr.bf16.gmra.mrb[0].mxu0 %v488
    %v2313 = vpop.f32.mrb[0].mxu0
    %v2314 = vadd.f32 %v2273, %v2313
    %v2315 = vpop.f32.mrb[0].mxu0
    %v2316 = vadd.f32 %v2275, %v2315
    %v2317 = vpop.f32.mrb[0].mxu0
    %v2318 = vpop.f32.mrb[0].mxu0
    %2319 = vdwg.mxu0
    %2320 = vmatprep.subr.bf16.mxu0 %v1985
    %2321 = vmatpush1.bf16.msra.mxu0 %v1984
    %2322 = vmatprep.subr.bf16.mxu0 %v1989
    %2323 = vmatpush1.bf16.msra.mxu0 %v1988
    %2324 = vmatprep.subr.bf16.mxu0 %v1993
    %2325 = vmatpush1.bf16.msra.mxu0 %v1992
    %2326 = vmatprep.subr.bf16.mxu0 %v1997
    %2327 = vmatpush1.bf16.msra.mxu0 %v1996
    %2328 = vmatprep.subr.bf16.mxu0 %v2001
    %2329 = vmatpush1.bf16.msra.mxu0 %v2000
    %2330 = vmatprep.subr.bf16.mxu0 %v2005
    %2331 = vmatpush1.bf16.msra.mxu0 %v2004
    %2332 = vmatprep.subr.bf16.mxu0 %v2009
    %2333 = vmatpush1.bf16.msra.mxu0 %v2008
    %2334 = vmatprep.subr.bf16.mxu0 %v2013
    %2335 = vmatpush1.bf16.msra.mxu0 %v2012
    %2336 = vmatprep.subr.bf16.mxu0 %v2017
    %2337 = vmatpush1.bf16.msra.mxu0 %v2016
    %2338 = vmatprep.subr.bf16.mxu0 %v2021
    %2339 = vmatpush1.bf16.msra.mxu0 %v2020
    %2340 = vmatprep.subr.bf16.mxu0 %v2025
    %2341 = vmatpush1.bf16.msra.mxu0 %v2024
    %2342 = vmatprep.subr.bf16.mxu0 %v2029
    %2343 = vmatpush1.bf16.msra.mxu0 %v2028
    %2344 = vmatprep.subr.bf16.mxu0 %v2033
    %2345 = vmatpush1.bf16.msra.mxu0 %v2032
    %2346 = vmatprep.subr.bf16.mxu0 %v2037
    %2347 = vmatpush1.bf16.msra.mxu0 %v2036
    %2348 = vmatprep.subr.bf16.mxu0 %v2041
    %2349 = vmatpush1.bf16.msra.mxu0 %v2040
    %2350 = vmatprep.subr.bf16.mxu0 %v2045
    %2351 = vmatpush1.bf16.msra.mxu0 %v2044
    %2352 = vmatprep.mubr.bf16.mxu0 %v487
    %2353 = vmatmul.mubr.bf16.gmra.mrb[0].mxu0 %v486
    %v2354 = vpop.f32.mrb[0].mxu0
    %v2355 = vadd.f32 %v1589, %v2354
    %v2356 = vpop.f32.mrb[0].mxu0
    %v2357 = vadd.f32 %v1593, %v2356
    %v2358 = vpop.f32.mrb[0].mxu0
    %v2359 = vpop.f32.mrb[0].mxu0
    %2360 = vdwg.mxu0
    %2361 = vmatprep.subr.bf16.mxu0 %v2049
    %2362 = vmatpush1.bf16.msra.mxu0 %v2048
    %2363 = vmatprep.subr.bf16.mxu0 %v2053
    %2364 = vmatpush1.bf16.msra.mxu0 %v2052
    %2365 = vmatprep.subr.bf16.mxu0 %v2057
    %2366 = vmatpush1.bf16.msra.mxu0 %v2056
    %2367 = vmatprep.subr.bf16.mxu0 %v2061
    %2368 = vmatpush1.bf16.msra.mxu0 %v2060
    %2369 = vmatprep.subr.bf16.mxu0 %v2065
    %2370 = vmatpush1.bf16.msra.mxu0 %v2064
    %2371 = vmatprep.subr.bf16.mxu0 %v2069
    %2372 = vmatpush1.bf16.msra.mxu0 %v2068
    %2373 = vmatprep.subr.bf16.mxu0 %v2073
    %2374 = vmatpush1.bf16.msra.mxu0 %v2072
    %2375 = vmatprep.subr.bf16.mxu0 %v2077
    %2376 = vmatpush1.bf16.msra.mxu0 %v2076
    %2377 = vmatprep.subr.bf16.mxu0 %v2081
    %2378 = vmatpush1.bf16.msra.mxu0 %v2080
    %2379 = vmatprep.subr.bf16.mxu0 %v2085
    %2380 = vmatpush1.bf16.msra.mxu0 %v2084
    %2381 = vmatprep.subr.bf16.mxu0 %v2089
    %2382 = vmatpush1.bf16.msra.mxu0 %v2088
    %2383 = vmatprep.subr.bf16.mxu0 %v2093
    %2384 = vmatpush1.bf16.msra.mxu0 %v2092
    %2385 = vmatprep.subr.bf16.mxu0 %v2097
    %2386 = vmatpush1.bf16.msra.mxu0 %v2096
    %2387 = vmatprep.subr.bf16.mxu0 %v2101
    %2388 = vmatpush1.bf16.msra.mxu0 %v2100
    %2389 = vmatprep.subr.bf16.mxu0 %v2105
    %2390 = vmatpush1.bf16.msra.mxu0 %v2104
    %2391 = vmatprep.subr.bf16.mxu0 %v2109
    %2392 = vmatpush1.bf16.msra.mxu0 %v2108
    %2393 = vmatprep.mubr.bf16.mxu0 %v489
    %2394 = vmatmul.mubr.bf16.gmra.mrb[0].mxu0 %v488
    %v2395 = vpop.f32.mrb[0].mxu0
    %v2396 = vadd.f32 %v2355, %v2395
    %v2397 = vpop.f32.mrb[0].mxu0
    %v2398 = vadd.f32 %v2357, %v2397
    %v2399 = vpop.f32.mrb[0].mxu0
    %v2400 = vpop.f32.mrb[0].mxu0
    %2401 = vdwg.mxu0
    %v2402 = vmax.f32 %v2314, 0.0
    %v2403 = vmax.f32 %v2316, 0.0
    %v2404 = vmax.f32 %v2396, 0.0
    %v2405 = vmax.f32 %v2398, 0.0
    %v2406 = vpack.c.bf16 %v2402, %v2402
    %v2407 = vpack.c.bf16 %v2403, %v2403
    %v2408 = vpack.c.bf16 %v2404, %v2404
    %v2409 = vpack.c.bf16 %v2405, %v2405
    %v2410 = vld [vmem:[#allocation15] sm:$0xf]
    %v2412 = vlaneseq
    %v2413 = vshrl.u32 %v2412, 7
    %v2414 = vsub.s32 0, %v2413
    %v2415 = vrot.slane %v2410, %v2414
    %v2416 = vlaneseq
    %v2417 = vshrl.u32 %v2416, 7
    %v2418 = vsub.s32 1, %v2417
    %v2419 = vrot.slane %v2410, %v2418
    %v2420 = vlaneseq
    %v2421 = vshrl.u32 %v2420, 7
    %v2422 = vsub.s32 2, %v2421
    %v2423 = vrot.slane %v2410, %v2422
    %v2424 = vlaneseq
    %v2425 = vshrl.u32 %v2424, 7
    %v2426 = vsub.s32 3, %v2425
    %v2427 = vrot.slane %v2410, %v2426
    %v2432 = vmul.f32 %v1444, %v2415
    %v2433 = vmul.f32 %v1445, %v2419
    %v2434 = vmul.f32 %v1446, %v2423
    %v2435 = vmul.f32 %v1447, %v2427
    %v2436 = vadd.f32 %v2432, %v2433
    %v2437 = vadd.f32 %v2436, %v2434
    %v2438 = vadd.f32 %v2437, %v2435
    %2439 = vadd.xlane.f32.xlu0 %v2438
    %v2440 = vpop.xlane.xlu0 %2439
    %v2441 = vld [vmem:[#allocation2] sm:$0x1]
    %v2443 = vlaneseq
    %v2444 = vshrl.u32 %v2443, 7
    %v2445 = vsub.s32 0, %v2444
    %v2446 = vrot.slane %v2441, %v2445
    %v2448 = vadd.f32 %v2440, %v2446
    %v2449 = vld [vmem:[#allocation17] sm:$0xf]
    %v2450 = vld [vmem:[#allocation17 + $0x4] sm:$0xf]
    %v2451 = vld [vmem:[#allocation17 + $0x8] sm:$0xf]
    %v2452 = vld [vmem:[#allocation17 + $0xc] sm:$0xf]
    %v2453 = vld [vmem:[#allocation17 + $0x10] sm:$0xf]
    %v2454 = vld [vmem:[#allocation17 + $0x14] sm:$0xf]
    %v2455 = vld [vmem:[#allocation17 + $0x18] sm:$0xf]
    %v2456 = vld [vmem:[#allocation17 + $0x1c] sm:$0xf]
    %v2457 = vld [vmem:[#allocation17 + $0x20] sm:$0xf]
    %v2458 = vld [vmem:[#allocation17 + $0x24] sm:$0xf]
    %v2459 = vld [vmem:[#allocation17 + $0x28] sm:$0xf]
    %v2460 = vld [vmem:[#allocation17 + $0x2c] sm:$0xf]
    %v2461 = vld [vmem:[#allocation17 + $0x30] sm:$0xf]
    %v2462 = vld [vmem:[#allocation17 + $0x34] sm:$0xf]
    %v2463 = vld [vmem:[#allocation17 + $0x38] sm:$0xf]
    %v2464 = vld [vmem:[#allocation17 + $0x3c] sm:$0xf]
    %v2465 = vld [vmem:[#allocation17 + $0x40] sm:$0xf]
    %v2466 = vld [vmem:[#allocation17 + $0x44] sm:$0xf]
    %v2467 = vld [vmem:[#allocation17 + $0x48] sm:$0xf]
    %v2468 = vld [vmem:[#allocation17 + $0x4c] sm:$0xf]
    %v2469 = vld [vmem:[#allocation17 + $0x50] sm:$0xf]
    %v2470 = vld [vmem:[#allocation17 + $0x54] sm:$0xf]
    %v2471 = vld [vmem:[#allocation17 + $0x58] sm:$0xf]
    %v2472 = vld [vmem:[#allocation17 + $0x5c] sm:$0xf]
    %v2473 = vld [vmem:[#allocation17 + $0x60] sm:$0xf]
    %v2474 = vld [vmem:[#allocation17 + $0x64] sm:$0xf]
    %v2475 = vld [vmem:[#allocation17 + $0x68] sm:$0xf]
    %v2476 = vld [vmem:[#allocation17 + $0x6c] sm:$0xf]
    %v2477 = vld [vmem:[#allocation17 + $0x70] sm:$0xf]
    %v2478 = vld [vmem:[#allocation17 + $0x74] sm:$0xf]
    %v2479 = vld [vmem:[#allocation17 + $0x78] sm:$0xf]
    %v2480 = vld [vmem:[#allocation17 + $0x7c] sm:$0xf]
    %v2481 = vld [vmem:[#allocation17 + $0x80] sm:$0xf]
    %v2482 = vld [vmem:[#allocation17 + $0x84] sm:$0xf]
    %v2483 = vld [vmem:[#allocation17 + $0x88] sm:$0xf]
    %v2484 = vld [vmem:[#allocation17 + $0x8c] sm:$0xf]
    %v2485 = vld [vmem:[#allocation17 + $0x90] sm:$0xf]
    %v2486 = vld [vmem:[#allocation17 + $0x94] sm:$0xf]
    %v2487 = vld [vmem:[#allocation17 + $0x98] sm:$0xf]
    %v2488 = vld [vmem:[#allocation17 + $0x9c] sm:$0xf]
    %v2489 = vld [vmem:[#allocation17 + $0xa0] sm:$0xf]
    %v2490 = vld [vmem:[#allocation17 + $0xa4] sm:$0xf]
    %v2491 = vld [vmem:[#allocation17 + $0xa8] sm:$0xf]
    %v2492 = vld [vmem:[#allocation17 + $0xac] sm:$0xf]
    %v2493 = vld [vmem:[#allocation17 + $0xb0] sm:$0xf]
    %v2494 = vld [vmem:[#allocation17 + $0xb4] sm:$0xf]
    %v2495 = vld [vmem:[#allocation17 + $0xb8] sm:$0xf]
    %v2496 = vld [vmem:[#allocation17 + $0xbc] sm:$0xf]
    %v2497 = vld [vmem:[#allocation17 + $0xc0] sm:$0xf]
    %v2498 = vld [vmem:[#allocation17 + $0xc4] sm:$0xf]
    %v2499 = vld [vmem:[#allocation17 + $0xc8] sm:$0xf]
    %v2500 = vld [vmem:[#allocation17 + $0xcc] sm:$0xf]
    %v2501 = vld [vmem:[#allocation17 + $0xd0] sm:$0xf]
    %v2502 = vld [vmem:[#allocation17 + $0xd4] sm:$0xf]
    %v2503 = vld [vmem:[#allocation17 + $0xd8] sm:$0xf]
    %v2504 = vld [vmem:[#allocation17 + $0xdc] sm:$0xf]
    %v2505 = vld [vmem:[#allocation17 + $0xe0] sm:$0xf]
    %v2506 = vld [vmem:[#allocation17 + $0xe4] sm:$0xf]
    %v2507 = vld [vmem:[#allocation17 + $0xe8] sm:$0xf]
    %v2508 = vld [vmem:[#allocation17 + $0xec] sm:$0xf]
    %v2509 = vld [vmem:[#allocation17 + $0xf0] sm:$0xf]
    %v2510 = vld [vmem:[#allocation17 + $0xf4] sm:$0xf]
    %v2511 = vld [vmem:[#allocation17 + $0xf8] sm:$0xf]
    %v2512 = vld [vmem:[#allocation17 + $0xfc] sm:$0xf]
    %v2513 = vld [vmem:[#allocation18] sm:$0x1]
    %v2515 = vlaneseq
    %v2516 = vshrl.u32 %v2515, 7
    %v2517 = vsub.s32 0, %v2516
    %v2518 = vrot.slane %v2513, %v2517
    %v2584 = vunpack.c.l.b16 %v2449
    %v2585 = vunpack.c.l.b16 %v2450
    %v2586 = vunpack.c.l.b16 %v2451
    %v2587 = vunpack.c.l.b16 %v2452
    %v2588 = vunpack.c.l.b16 %v2453
    %v2589 = vunpack.c.l.b16 %v2454
    %v2590 = vunpack.c.l.b16 %v2455
    %v2591 = vunpack.c.l.b16 %v2456
    %v2592 = vunpack.c.l.b16 %v2457
    %v2593 = vunpack.c.l.b16 %v2458
    %v2594 = vunpack.c.l.b16 %v2459
    %v2595 = vunpack.c.l.b16 %v2460
    %v2596 = vunpack.c.l.b16 %v2461
    %v2597 = vunpack.c.l.b16 %v2462
    %v2598 = vunpack.c.l.b16 %v2463
    %v2599 = vunpack.c.l.b16 %v2464
    %v2600 = vunpack.c.l.b16 %v2465
    %v2601 = vunpack.c.l.b16 %v2466
    %v2602 = vunpack.c.l.b16 %v2467
    %v2603 = vunpack.c.l.b16 %v2468
    %v2604 = vunpack.c.l.b16 %v2469
    %v2605 = vunpack.c.l.b16 %v2470
    %v2606 = vunpack.c.l.b16 %v2471
    %v2607 = vunpack.c.l.b16 %v2472
    %v2608 = vunpack.c.l.b16 %v2473
    %v2609 = vunpack.c.l.b16 %v2474
    %v2610 = vunpack.c.l.b16 %v2475
    %v2611 = vunpack.c.l.b16 %v2476
    %v2612 = vunpack.c.l.b16 %v2477
    %v2613 = vunpack.c.l.b16 %v2478
    %v2614 = vunpack.c.l.b16 %v2479
    %v2615 = vunpack.c.l.b16 %v2480
    %v2616 = vunpack.c.l.b16 %v2481
    %v2617 = vunpack.c.l.b16 %v2482
    %v2618 = vunpack.c.l.b16 %v2483
    %v2619 = vunpack.c.l.b16 %v2484
    %v2620 = vunpack.c.l.b16 %v2485
    %v2621 = vunpack.c.l.b16 %v2486
    %v2622 = vunpack.c.l.b16 %v2487
    %v2623 = vunpack.c.l.b16 %v2488
    %v2624 = vunpack.c.l.b16 %v2489
    %v2625 = vunpack.c.l.b16 %v2490
    %v2626 = vunpack.c.l.b16 %v2491
    %v2627 = vunpack.c.l.b16 %v2492
    %v2628 = vunpack.c.l.b16 %v2493
    %v2629 = vunpack.c.l.b16 %v2494
    %v2630 = vunpack.c.l.b16 %v2495
    %v2631 = vunpack.c.l.b16 %v2496
    %v2632 = vunpack.c.l.b16 %v2497
    %v2633 = vunpack.c.l.b16 %v2498
    %v2634 = vunpack.c.l.b16 %v2499
    %v2635 = vunpack.c.l.b16 %v2500
    %v2636 = vunpack.c.l.b16 %v2501
    %v2637 = vunpack.c.l.b16 %v2502
    %v2638 = vunpack.c.l.b16 %v2503
    %v2639 = vunpack.c.l.b16 %v2504
    %v2640 = vunpack.c.l.b16 %v2505
    %v2641 = vunpack.c.l.b16 %v2506
    %v2642 = vunpack.c.l.b16 %v2507
    %v2643 = vunpack.c.l.b16 %v2508
    %v2644 = vunpack.c.l.b16 %v2509
    %v2645 = vunpack.c.l.b16 %v2510
    %v2646 = vunpack.c.l.b16 %v2511
    %v2647 = vunpack.c.l.b16 %v2512
    %v2648 = vpack.c.b16 %v2585, %v2584
    %v2649 = vpack.c.b16 %v2587, %v2586
    %v2650 = vpack.c.b16 %v2589, %v2588
    %v2651 = vpack.c.b16 %v2591, %v2590
    %v2652 = vpack.c.b16 %v2593, %v2592
    %v2653 = vpack.c.b16 %v2595, %v2594
    %v2654 = vpack.c.b16 %v2597, %v2596
    %v2655 = vpack.c.b16 %v2599, %v2598
    %v2656 = vpack.c.b16 %v2601, %v2600
    %v2657 = vpack.c.b16 %v2603, %v2602
    %v2658 = vpack.c.b16 %v2605, %v2604
    %v2659 = vpack.c.b16 %v2607, %v2606
    %v2660 = vpack.c.b16 %v2609, %v2608
    %v2661 = vpack.c.b16 %v2611, %v2610
    %v2662 = vpack.c.b16 %v2613, %v2612
    %v2663 = vpack.c.b16 %v2615, %v2614
    %v2664 = vpack.c.b16 %v2617, %v2616
    %v2665 = vpack.c.b16 %v2619, %v2618
    %v2666 = vpack.c.b16 %v2621, %v2620
    %v2667 = vpack.c.b16 %v2623, %v2622
    %v2668 = vpack.c.b16 %v2625, %v2624
    %v2669 = vpack.c.b16 %v2627, %v2626
    %v2670 = vpack.c.b16 %v2629, %v2628
    %v2671 = vpack.c.b16 %v2631, %v2630
    %v2672 = vpack.c.b16 %v2633, %v2632
    %v2673 = vpack.c.b16 %v2635, %v2634
    %v2674 = vpack.c.b16 %v2637, %v2636
    %v2675 = vpack.c.b16 %v2639, %v2638
    %v2676 = vpack.c.b16 %v2641, %v2640
    %v2677 = vpack.c.b16 %v2643, %v2642
    %v2678 = vpack.c.b16 %v2645, %v2644
    %v2679 = vpack.c.b16 %v2647, %v2646
    %2712 = vmatprep.subr.bf16.mxu0 0
    %2713 = vmatpush1.bf16.msra.mxu0 %v2648
    %2714 = vmatprep.subr.bf16.mxu0 0
    %2715 = vmatpush1.bf16.msra.mxu0 %v2649
    %2716 = vmatprep.subr.bf16.mxu0 0
    %2717 = vmatpush1.bf16.msra.mxu0 %v2650
    %2718 = vmatprep.subr.bf16.mxu0 0
    %2719 = vmatpush1.bf16.msra.mxu0 %v2651
    %2720 = vmatprep.subr.bf16.mxu0 0
    %2721 = vmatpush1.bf16.msra.mxu0 %v2652
    %2722 = vmatprep.subr.bf16.mxu0 0
    %2723 = vmatpush1.bf16.msra.mxu0 %v2653
    %2724 = vmatprep.subr.bf16.mxu0 0
    %2725 = vmatpush1.bf16.msra.mxu0 %v2654
    %2726 = vmatprep.subr.bf16.mxu0 0
    %2727 = vmatpush1.bf16.msra.mxu0 %v2655
    %2728 = vmatprep.subr.bf16.mxu0 0
    %2729 = vmatpush1.bf16.msra.mxu0 %v2656
    %2730 = vmatprep.subr.bf16.mxu0 0
    %2731 = vmatpush1.bf16.msra.mxu0 %v2657
    %2732 = vmatprep.subr.bf16.mxu0 0
    %2733 = vmatpush1.bf16.msra.mxu0 %v2658
    %2734 = vmatprep.subr.bf16.mxu0 0
    %2735 = vmatpush1.bf16.msra.mxu0 %v2659
    %2736 = vmatprep.subr.bf16.mxu0 0
    %2737 = vmatpush1.bf16.msra.mxu0 %v2660
    %2738 = vmatprep.subr.bf16.mxu0 0
    %2739 = vmatpush1.bf16.msra.mxu0 %v2661
    %2740 = vmatprep.subr.bf16.mxu0 0
    %2741 = vmatpush1.bf16.msra.mxu0 %v2662
    %2742 = vmatprep.subr.bf16.mxu0 0
    %2743 = vmatpush1.bf16.msra.mxu0 %v2663
    %2744 = vmatprep.mubr.bf16.mxu0 %v2407
    %2745 = vmatmul.mubr.bf16.gmra.mrb[0].mxu0 %v2406
    %v2746 = vpop.f32.mrb[0].mxu0
    %v2747 = vadd.f32 %v2518, %v2746
    %v2748 = vpop.f32.mrb[0].mxu0
    %v2749 = vpop.f32.mrb[0].mxu0
    %v2750 = vpop.f32.mrb[0].mxu0
    %2751 = vdwg.mxu0
    %2752 = vmatprep.subr.bf16.mxu0 0
    %2753 = vmatpush1.bf16.msra.mxu0 %v2664
    %2754 = vmatprep.subr.bf16.mxu0 0
    %2755 = vmatpush1.bf16.msra.mxu0 %v2665
    %2756 = vmatprep.subr.bf16.mxu0 0
    %2757 = vmatpush1.bf16.msra.mxu0 %v2666
    %2758 = vmatprep.subr.bf16.mxu0 0
    %2759 = vmatpush1.bf16.msra.mxu0 %v2667
    %2760 = vmatprep.subr.bf16.mxu0 0
    %2761 = vmatpush1.bf16.msra.mxu0 %v2668
    %2762 = vmatprep.subr.bf16.mxu0 0
    %2763 = vmatpush1.bf16.msra.mxu0 %v2669
    %2764 = vmatprep.subr.bf16.mxu0 0
    %2765 = vmatpush1.bf16.msra.mxu0 %v2670
    %2766 = vmatprep.subr.bf16.mxu0 0
    %2767 = vmatpush1.bf16.msra.mxu0 %v2671
    %2768 = vmatprep.subr.bf16.mxu0 0
    %2769 = vmatpush1.bf16.msra.mxu0 %v2672
    %2770 = vmatprep.subr.bf16.mxu0 0
    %2771 = vmatpush1.bf16.msra.mxu0 %v2673
    %2772 = vmatprep.subr.bf16.mxu0 0
    %2773 = vmatpush1.bf16.msra.mxu0 %v2674
    %2774 = vmatprep.subr.bf16.mxu0 0
    %2775 = vmatpush1.bf16.msra.mxu0 %v2675
    %2776 = vmatprep.subr.bf16.mxu0 0
    %2777 = vmatpush1.bf16.msra.mxu0 %v2676
    %2778 = vmatprep.subr.bf16.mxu0 0
    %2779 = vmatpush1.bf16.msra.mxu0 %v2677
    %2780 = vmatprep.subr.bf16.mxu0 0
    %2781 = vmatpush1.bf16.msra.mxu0 %v2678
    %2782 = vmatprep.subr.bf16.mxu0 0
    %2783 = vmatpush1.bf16.msra.mxu0 %v2679
    %2784 = vmatprep.mubr.bf16.mxu0 %v2409
    %2785 = vmatmul.mubr.bf16.gmra.mrb[0].mxu0 %v2408
    %v2786 = vpop.f32.mrb[0].mxu0
    %v2787 = vadd.f32 %v2747, %v2786
    %v2788 = vpop.f32.mrb[0].mxu0
    %v2789 = vpop.f32.mrb[0].mxu0
    %v2790 = vpop.f32.mrb[0].mxu0
    %2791 = vdwg.mxu0
    %vm2792 = vcmask 64512
    %v2793 = vsel %vm2792, %v2787, 0.0
    %2794 = vadd.xlane.f32.xlu0 %v2793
    %v2795 = vpop.xlane.xlu0 %2794
    %v2796 = vrcp.pop 8.0
    %v2797 = vmul.f32 %v2795, %v2796
    %2799 = vset.pattern.permute.xlu0 0
    %2800 = vperm.xlu0 %2799, %v2448
    %v2801 = vpop.permute.xlu0 %2800
    %v2803 = vadd.f32 %v2801, %v2787
    %v2804 = vsub.f32 %v2803, %v2797
    %2805 = vst.msk [vmem:[#allocation20] sm:$0xff] %vm2792, %v2804
    // Predicated region
    $region86: #{tpu_custom_call.1} parent=1 // pred_check
      _
    $region87: #{tpu_custom_call.1} parent=1 // pred_check_branch
      %2807 = sbr.rel (0) target = $region89
    $region88: #{tpu_custom_call.1} parent=1 // pred_region
      %s2809 = ssub.s32 128, 128
      %2810 = vsyncadd [#allocation5], %s2809
      %s2812 = sshll.u32 [#allocation20], 4
      %s2813 = int_to_ptr.vmem [resolvable:$true] %s2812
      %2815 = dma.vmem_to_hbm [thread:$0]  %s2813, 128, %s11, [#allocation5]
    $region89: #{tpu_custom_call.1} parent=1 // pred_fallthru
      _
    // Predicated region
    $region90: #{tpu_custom_call.1} parent=1 // pred_check
      _
    $region91: #{tpu_custom_call.1} parent=1 // pred_check_branch
      %2817 = sbr.rel (0) target = $region93
    $region92: #{tpu_custom_call.1} parent=1 // pred_region
      %2818 = dma.done [#allocation5], 128
    $region93: #{tpu_custom_call.1} parent=1 // pred_fallthru
      _
    %2819 = vsyncpa [#allocation4], 1
    %2820 = vsyncpa [#allocation7], 1
    %2821 = vsyncpa [#allocation10], 1
    %2822 = vsyncpa [#allocation13], 1
    %2823 = vsyncpa [#allocation16], 1
    %2824 = vsyncpa [#allocation19], 1
    %2825 = vsyncpa [#allocation5], 1

</llo_original>
